<compile_context>
chip_gen: v6e
topology: v6e:2x2x1
jax: 0.10.0
libtpu: 0.0.40
codegen_flags: <defaults>
</compile_context>

<pallas_src>
import jax
import jax.numpy as jnp
from jax.experimental import pallas as pl
from jax.experimental.pallas import tpu as pltpu

EPS = 1e-5

try:
    _VMEM_CAP = int(pltpu.get_tpu_info().vmem_capacity_bytes)
except Exception:  # pragma: no cover - conservative fallback (v7x per-TC VMEM)
    _VMEM_CAP = 64 * 1024 * 1024


def _round_up(n, m):
    return ((n + m - 1) // m) * m


def _cdiv(a, b):
    return (a + b - 1) // b


# Row layout of the packed parameter-vector slab (each row padded to a common width).
_VB1, _VG1, _VBE1, _VB2, _VG2, _VBE2, _VB3, _VB4, _VW4B, _VW5, _VB5 = range(11)


def _make_kernel(batch, TB, NB, D, R, stage_x, has_pad):
    """Build the fused 3-phase kernel.  `batch` is the real (unpadded) batch size."""
    inv_n = 1.0 / float(batch)
    last = NB - 1
    valid_last = batch - (NB - 1) * TB   # number of real rows in the last tile (>=1)

    def kernel(x_ref, t_ref, w1_ref, w2_ref, w3_ref, w4a_ref, vec_ref,
               out_ref,
               st1a, st1b, st2a, st2b, *stage_scratch):
        phase = pl.program_id(0)
        tile = pl.program_id(1)

        vec = vec_ref[...]                      # (11, max(2D,2R)) tiny resident slab
        b1, g1, be1 = vec[_VB1:_VB1 + 1, :2 * D], vec[_VG1:_VG1 + 1, :2 * D], vec[_VBE1:_VBE1 + 1, :2 * D]
        b2, g2, be2 = vec[_VB2:_VB2 + 1, :D], vec[_VG2:_VG2 + 1, :D], vec[_VBE2:_VBE2 + 1, :D]
        b3 = vec[_VB3:_VB3 + 1, :R]
        b4 = vec[_VB4:_VB4 + 1, :2 * R]
        w4b = vec[_VW4B:_VW4B + 1, :2 * R]
        w5 = vec[_VW5:_VW5 + 1, :2 * R]
        b5 = vec[_VB5:_VB5 + 1, :1]

        def load_x():
            if stage_x:
                off = pl.multiple_of(tile * TB, 8)
                return stage_scratch[0][pl.ds(off, TB), :]
            return x_ref[...]

        def fu1(xv):
            return jnp.dot(xv, w1_ref[...], preferred_element_type=jnp.float32) + b1

        def fu2(a1):
            return jnp.dot(a1, w2_ref[...], preferred_element_type=jnp.float32) + b2

        def affine_relu(h, scale_ref, shift_ref):
            # Folded BatchNorm: scale = gamma*rstd, shift = beta - mean*gamma*rstd.
            return jnp.maximum(h * scale_ref[...] + shift_ref[...], 0.0)

        def accumulate(h, sum_ref, sq_ref):
            # Padding rows exist only on the last tile; mask threshold is static.
            if has_pad:
                @pl.when(tile == last)
                def _():
                    row = jax.lax.broadcasted_iota(jnp.int32, h.shape, 0)
                    hm = jnp.where(row < valid_last, h, 0.0)
                    sum_ref[...] += jnp.sum(hm, axis=0, keepdims=True)
                    sq_ref[...] += jnp.sum(hm * hm, axis=0, keepdims=True)

                @pl.when(tile != last)
                def _():
                    sum_ref[...] += jnp.sum(h, axis=0, keepdims=True)
                    sq_ref[...] += jnp.sum(h * h, axis=0, keepdims=True)
            else:
                sum_ref[...] += jnp.sum(h, axis=0, keepdims=True)
                sq_ref[...] += jnp.sum(h * h, axis=0, keepdims=True)

        def finalize(sum_ref, sq_ref, g, b):
            mean = sum_ref[...] * inv_n
            var = sq_ref[...] * inv_n - mean * mean   # biased variance (PyTorch training BN)
            scale = jax.lax.rsqrt(var + EPS) * g
            sum_ref[...] = scale                       # reuse scratch: now holds BN scale
            sq_ref[...] = b - mean * scale             # reuse scratch: now holds BN shift

        @pl.when(jnp.logical_and(phase == 0, tile == 0))
        def _init():
            st1a[...] = jnp.zeros_like(st1a)
            st1b[...] = jnp.zeros_like(st1b)
            st2a[...] = jnp.zeros_like(st2a)
            st2b[...] = jnp.zeros_like(st2b)

        @pl.when(phase == 0)
        def _phase0():
            xv = x_ref[...]
            if stage_x:
                off = pl.multiple_of(tile * TB, 8)
                stage_scratch[0][pl.ds(off, TB), :] = xv
            accumulate(fu1(xv), st1a, st1b)

            @pl.when(tile == last)
            def _():
                finalize(st1a, st1b, g1, be1)

        @pl.when(phase == 1)
        def _phase1():
            a1 = affine_relu(fu1(load_x()), st1a, st1b)
            accumulate(fu2(a1), st2a, st2b)

            @pl.when(tile == last)
            def _():
                finalize(st2a, st2b, g2, be2)

        @pl.when(phase == 2)
        def _phase2():
            a1 = affine_relu(fu1(load_x()), st1a, st1b)
            a2 = affine_relu(fu2(a1), st2a, st2b)
            rep = jax.nn.sigmoid(
                jnp.dot(a2, w3_ref[...], preferred_element_type=jnp.float32) + b3)
            # cat([rep, t], 1) @ W4 == rep @ W4[:R] + t * W4[R]   (K=1 -> VPU bcast mul)
            h4 = jnp.dot(rep, w4a_ref[...], preferred_element_type=jnp.float32)
            h4 = jnp.maximum(h4 + t_ref[...] * w4b + b4, 0.0)
            # fu5: single output column -> VPU multiply + lane reduction (no MXU).
            out = jnp.sum(h4 * w5, axis=-1, keepdims=True) + b5
            # Fused output: columns [0:R) = representation, column R = scalar output.
            out_ref[...] = jnp.concatenate([rep, out], axis=1)

    return kernel


def balanced_nn_forward(x, t, params, *, block_rows=4096, stage=None):
    """Fused forward pass.  Returns (out [B,1], representation [B,R])."""
    B, D = x.shape
    R = params["w3"].shape[1]

    # --- batch tiling: large tiles (amortize per-step dispatch), minimal padding ---
    max_tb = _round_up(max(8, min(block_rows, B)), 8)
    NB = _cdiv(B, max_tb)
    TB = _round_up(_cdiv(B, NB), 8)
    B_pad = TB * NB
    has_pad = B_pad != B

    if has_pad:
        x = jnp.pad(x, ((0, B_pad - B), (0, 0)))
        t = jnp.pad(t, ((0, B_pad - B), (0, 0)))

    # --- optionally stage x in persistent VMEM (read HBM once instead of 3x) ---
    x_bytes = B_pad * D * 4
    stage_budget = max(0, _VMEM_CAP // 2 - 4 * 1024 * 1024)  # e.g. ~28 MiB v7x, ~60 MiB v5e/v6e
    stage_x = (x_bytes <= stage_budget) if stage is None else bool(stage)

    # --- pack all tiny (1, .) parameter vectors into one resident slab (single DMA) ---
    vec_rows = (params["b1"], params["g1"], params["be1"],
                params["b2"], params["g2"], params["be2"],
                params["b3"], params["b4"], params["w4b"], params["w5"], params["b5"])
    vec_w = max(int(r.shape[-1]) for r in vec_rows)
    vec = jnp.concatenate(
        [jnp.pad(r.reshape(1, -1), ((0, 0), (0, vec_w - r.shape[-1]))) for r in vec_rows],
        axis=0)
    mats = (params["w1"], params["w2"], params["w3"], params["w4a"])

    def resident_spec(arr):
        # Full-array block with a constant index_map: fetched once, stays in VMEM.
        return pl.BlockSpec(arr.shape, lambda p, i: (0, 0))

    if stage_x:
        # x only streamed during phase 0 (pinned to block 0 afterwards -> no re-DMA).
        x_spec = pl.BlockSpec((TB, D), lambda p, i: (jnp.where(p == 0, i, 0), 0))
    else:
        x_spec = pl.BlockSpec((TB, D), lambda p, i: (i, 0))
    # t only consumed (and DMA'd) in phase 2.
    t_spec = pl.BlockSpec((TB, 1), lambda p, i: (jnp.where(p == 2, i, 0), 0))
    # Output block only advances in phase 2 -> no garbage writeback in phases 0/1.
    out_spec = pl.BlockSpec((TB, R + 1), lambda p, i: (jnp.where(p == 2, i, 0), 0))

    in_specs = [x_spec, t_spec] + [resident_spec(m) for m in mats] + [resident_spec(vec)]

    scratch = [
        pltpu.VMEM((1, 2 * D), jnp.float32),   # bn1: sum   -> folded scale
        pltpu.VMEM((1, 2 * D), jnp.float32),   # bn1: sumsq -> folded shift
        pltpu.VMEM((1, D), jnp.float32),       # bn2: sum   -> folded scale
        pltpu.VMEM((1, D), jnp.float32),       # bn2: sumsq -> folded shift
    ]
    if stage_x:
        scratch.append(pltpu.VMEM((B_pad, D), jnp.float32))   # staged copy of x

    vmem_limit = 32 * 1024 * 1024
    if stage_x:
        vmem_limit = min(max(vmem_limit, x_bytes + 16 * 1024 * 1024),
                         max(32 * 1024 * 1024, _VMEM_CAP - 8 * 1024 * 1024))

    weight_elems = sum(int(m.size) for m in mats) + int(vec.size)
    x_passes = 1 if stage_x else 3
    cost = pl.CostEstimate(
        flops=int(B_pad) * (20 * D * D + 2 * D * R + 4 * R * R + 16 * D + 12 * R),
        transcendentals=int(B_pad) * R + 3 * D,
        bytes_accessed=4 * (int(B_pad) * (x_passes * D + 1 + R + 1) + weight_elems),
    )

    packed = pl.pallas_call(
        _make_kernel(B, TB, NB, D, R, stage_x, has_pad),
        grid_spec=pltpu.PrefetchScalarGridSpec(
            num_scalar_prefetch=0,
            grid=(3, NB),                      # (phase, batch tile); tiles innermost
            in_specs=in_specs,
            out_specs=out_spec,
            scratch_shapes=scratch,
        ),
        out_shape=jax.ShapeDtypeStruct((B_pad, R + 1), jnp.float32),
        compiler_params=pltpu.CompilerParams(
            # Tile axis carries the BN stat accumulators and the phase axis is
            # sequential, so both stay "arbitrary" (training-mode BatchNorm precludes
            # parallel batch tiles without a cross-core reduction).
            dimension_semantics=("arbitrary", "arbitrary"),
            vmem_limit_bytes=int(vmem_limit),
        ),
        cost_estimate=cost,
    )(x, t, *mats, vec)

    out = packed[:B, R:R + 1]
    rep = packed[:B, :R]
    return out, rep


def init_params(key, input_size, representation_size):
    """Deterministic init mimicking PyTorch nn.Linear default (U[-1/sqrt(fan_in), +])."""
    D, R = input_size, representation_size

    def linear(k, fan_in, fan_out):
        kw, kb = jax.random.split(k)
        bound = 1.0 / jnp.sqrt(fan_in)
        w = jax.random.uniform(kw, (fan_in, fan_out), jnp.float32, -bound, bound)
        b = jax.random.uniform(kb, (1, fan_out), jnp.float32, -bound, bound)
        return w, b

    k1, k2, k3, k4, k5 = jax.random.split(key, 5)
    w1, b1 = linear(k1, D, 2 * D)
    w2, b2 = linear(k2, 2 * D, D)
    w3, b3 = linear(k3, D, R)
    w4, b4 = linear(k4, R + 1, 2 * R)
    w5, b5 = linear(k5, 2 * R, 1)

    return dict(
        w1=w1, b1=b1,
        g1=jnp.ones((1, 2 * D), jnp.float32), be1=jnp.zeros((1, 2 * D), jnp.float32),
        w2=w2, b2=b2,
        g2=jnp.ones((1, D), jnp.float32), be2=jnp.zeros((1, D), jnp.float32),
        w3=w3, b3=b3,
        w4a=w4[:R, :], w4b=w4[R:R + 1, :], b4=b4,   # w4b is the t-row of W4, kept as (1, 2R)
        w5=jnp.transpose(w5), b5=b5,                # w5 stored as a (1, 2R) row vector
    )


def reference_forward(x, t, params):
    """Pure-JAX reference (training-mode BatchNorm, biased variance)."""
    def bn_relu(h, g, b):
        m = jnp.mean(h, axis=0, keepdims=True)
        v = jnp.mean((h - m) ** 2, axis=0, keepdims=True)
        return jnp.maximum((h - m) / jnp.sqrt(v + EPS) * g + b, 0.0)

    h = bn_relu(x @ params["w1"] + params["b1"], params["g1"], params["be1"])
    h = bn_relu(h @ params["w2"] + params["b2"], params["g2"], params["be2"])
    rep = jax.nn.sigmoid(h @ params["w3"] + params["b3"])
    h = jnp.maximum(rep @ params["w4a"] + t @ params["w4b"] + params["b4"], 0.0)
    out = h @ params["w5"].T + params["b5"]
    return out, rep


if __name__ == "__main__":
    input_size = 16
    representation_size = 8

    key = jax.random.PRNGKey(0)
    kx, kt, kp = jax.random.split(key, 3)
    params = init_params(kp, input_size, representation_size)

    # Case 1: single tile, no padding (staged x).
    # Case 2: multi-tile stats + padding mask on the last tile (staged x).
    # Case 3: same shapes with the non-staged fallback path (x re-read from HBM).
    for batch, block_rows, stage in ((8, 4096, None), (20, 8, None), (20, 8, False)):
        x = jax.random.normal(kx, (batch, input_size), jnp.float32)
        t = jax.random.bernoulli(kt, 0.5, (batch, 1)).astype(jnp.float32)

        out, rep = balanced_nn_forward(x, t, params, block_rows=block_rows, stage=stage)
        jax.block_until_ready((out, rep))

        ref_out, ref_rep = reference_forward(x, t, params)
        assert jnp.allclose(out, ref_out, atol=1e-4, rtol=1e-4), (
            f"out mismatch (batch={batch}, block_rows={block_rows}, stage={stage})")
        assert jnp.allclose(rep, ref_rep, atol=1e-4, rtol=1e-4), (
            f"rep mismatch (batch={batch}, block_rows={block_rows}, stage={stage})")

    print("KERNEL_OK")
</pallas_src>

<mosaic_0001>
module attributes {stable_mosaic.version = 11 : i64} {
  func.func @kernel(%arg0: i32, %arg1: i32, %arg2: memref<8x16xf32, #tpu.memory_space<vmem>>, %arg3: memref<8x1xf32, #tpu.memory_space<vmem>>, %arg4: memref<16x32xf32, #tpu.memory_space<vmem>>, %arg5: memref<32x16xf32, #tpu.memory_space<vmem>>, %arg6: memref<16x8xf32, #tpu.memory_space<vmem>>, %arg7: memref<8x16xf32, #tpu.memory_space<vmem>>, %arg8: memref<11x32xf32, #tpu.memory_space<vmem>>, %arg9: memref<8x9xf32, #tpu.memory_space<vmem>>, %arg10: memref<1x32xf32, #tpu.memory_space<vmem>>, %arg11: memref<1x32xf32, #tpu.memory_space<vmem>>, %arg12: memref<1x16xf32, #tpu.memory_space<vmem>>, %arg13: memref<1x16xf32, #tpu.memory_space<vmem>>, %arg14: memref<8x16xf32, #tpu.memory_space<vmem>>) attributes {dimension_semantics = [#tpu.dimension_semantics<arbitrary>, #tpu.dimension_semantics<arbitrary>], iteration_bounds = array<i64: 3, 1>, scalar_prefetch = 0 : i64, scratch_operands = 5 : i64, tpu.core_type = #tpu.core_type<tc>, window_params = [{transform_indices = @transform_0, window_bounds = array<i64: 8, 16>}, {transform_indices = @transform_1, window_bounds = array<i64: 8, 1>}, {pipeline_mode = #tpu.pipeline_mode<synchronous>, transform_indices = @transform_2, window_bounds = array<i64: 16, 32>}, {pipeline_mode = #tpu.pipeline_mode<synchronous>, transform_indices = @transform_3, window_bounds = array<i64: 32, 16>}, {pipeline_mode = #tpu.pipeline_mode<synchronous>, transform_indices = @transform_4, window_bounds = array<i64: 16, 8>}, {pipeline_mode = #tpu.pipeline_mode<synchronous>, transform_indices = @transform_5, window_bounds = array<i64: 8, 16>}, {pipeline_mode = #tpu.pipeline_mode<synchronous>, transform_indices = @transform_6, window_bounds = array<i64: 11, 32>}, {transform_indices = @transform_7, window_bounds = array<i64: 8, 9>}]} {
    %c0 = arith.constant 0 : index
    %c0_0 = arith.constant 0 : index
    %0 = vector.load %arg8[%c0, %c0_0] : memref<11x32xf32, #tpu.memory_space<vmem>>, vector<11x32xf32>
    %1 = vector.extract_strided_slice %0 {offsets = [0, 0], sizes = [1, 32], strides = [1, 1]} : vector<11x32xf32> to vector<1x32xf32>
    %2 = vector.extract_strided_slice %0 {offsets = [1, 0], sizes = [1, 32], strides = [1, 1]} : vector<11x32xf32> to vector<1x32xf32>
    %3 = vector.extract_strided_slice %0 {offsets = [2, 0], sizes = [1, 32], strides = [1, 1]} : vector<11x32xf32> to vector<1x32xf32>
    %4 = vector.extract_strided_slice %0 {offsets = [3, 0], sizes = [1, 16], strides = [1, 1]} : vector<11x32xf32> to vector<1x16xf32>
    %5 = vector.extract_strided_slice %0 {offsets = [4, 0], sizes = [1, 16], strides = [1, 1]} : vector<11x32xf32> to vector<1x16xf32>
    %6 = vector.extract_strided_slice %0 {offsets = [5, 0], sizes = [1, 16], strides = [1, 1]} : vector<11x32xf32> to vector<1x16xf32>
    %7 = vector.extract_strided_slice %0 {offsets = [6, 0], sizes = [1, 8], strides = [1, 1]} : vector<11x32xf32> to vector<1x8xf32>
    %8 = vector.extract_strided_slice %0 {offsets = [7, 0], sizes = [1, 16], strides = [1, 1]} : vector<11x32xf32> to vector<1x16xf32>
    %9 = vector.extract_strided_slice %0 {offsets = [8, 0], sizes = [1, 16], strides = [1, 1]} : vector<11x32xf32> to vector<1x16xf32>
    %10 = vector.extract_strided_slice %0 {offsets = [9, 0], sizes = [1, 16], strides = [1, 1]} : vector<11x32xf32> to vector<1x16xf32>
    %11 = vector.extract_strided_slice %0 {offsets = [10, 0], sizes = [1, 1], strides = [1, 1]} : vector<11x32xf32> to vector<1x1xf32>
    %c0_i32 = arith.constant 0 : i32
    %12 = arith.cmpi eq, %arg0, %c0_i32 : i32
    %c0_i32_1 = arith.constant 0 : i32
    %13 = arith.cmpi eq, %arg1, %c0_i32_1 : i32
    %14 = arith.andi %12, %13 : i1
    %15 = arith.extui %14 : i1 to i32
    %c0_i32_2 = arith.constant 0 : i32
    %16 = arith.cmpi ne, %15, %c0_i32_2 : i32
    scf.if %16 {
      %cst = arith.constant 0.000000e+00 : f32
      %26 = vector.broadcast %cst : f32 to vector<1x32xf32>
      %c0_7 = arith.constant 0 : index
      %c0_8 = arith.constant 0 : index
      %27 = vector.load %arg10[%c0_7, %c0_8] : memref<1x32xf32, #tpu.memory_space<vmem>>, vector<1x32xf32>
      tpu.vector_store %arg10[%c0_7, %c0_8], %26 {strides = array<i32>} : memref<1x32xf32, #tpu.memory_space<vmem>>, vector<1x32xf32>,
      %cst_9 = arith.constant 0.000000e+00 : f32
      %28 = vector.broadcast %cst_9 : f32 to vector<1x32xf32>
      %c0_10 = arith.constant 0 : index
      %c0_11 = arith.constant 0 : index
      %29 = vector.load %arg11[%c0_10, %c0_11] : memref<1x32xf32, #tpu.memory_space<vmem>>, vector<1x32xf32>
      tpu.vector_store %arg11[%c0_10, %c0_11], %28 {strides = array<i32>} : memref<1x32xf32, #tpu.memory_space<vmem>>, vector<1x32xf32>,
      %cst_12 = arith.constant 0.000000e+00 : f32
      %30 = vector.broadcast %cst_12 : f32 to vector<1x16xf32>
      %c0_13 = arith.constant 0 : index
      %c0_14 = arith.constant 0 : index
      %31 = vector.load %arg12[%c0_13, %c0_14] : memref<1x16xf32, #tpu.memory_space<vmem>>, vector<1x16xf32>
      tpu.vector_store %arg12[%c0_13, %c0_14], %30 {strides = array<i32>} : memref<1x16xf32, #tpu.memory_space<vmem>>, vector<1x16xf32>,
      %cst_15 = arith.constant 0.000000e+00 : f32
      %32 = vector.broadcast %cst_15 : f32 to vector<1x16xf32>
      %c0_16 = arith.constant 0 : index
      %c0_17 = arith.constant 0 : index
      %33 = vector.load %arg13[%c0_16, %c0_17] : memref<1x16xf32, #tpu.memory_space<vmem>>, vector<1x16xf32>
      tpu.vector_store %arg13[%c0_16, %c0_17], %32 {strides = array<i32>} : memref<1x16xf32, #tpu.memory_space<vmem>>, vector<1x16xf32>,
    } else {
    }
    %c0_i32_3 = arith.constant 0 : i32
    %17 = arith.cmpi eq, %arg0, %c0_i32_3 : i32
    %18 = arith.extui %17 : i1 to i32
    %c0_i32_4 = arith.constant 0 : i32
    %19 = arith.cmpi ne, %18, %c0_i32_4 : i32
    scf.if %19 {
      %c0_7 = arith.constant 0 : index
      %c0_8 = arith.constant 0 : index
      %26 = vector.load %arg2[%c0_7, %c0_8] : memref<8x16xf32, #tpu.memory_space<vmem>>, vector<8x16xf32>
      %c8_i32 = arith.constant 8 : i32
      %27 = arith.muli %arg1, %c8_i32 : i32
      %28 = tpu.assume_multiple %27, 8 : i32
      %29 = arith.index_cast %28 : i32 to index
      %c0_9 = arith.constant 0 : index
      %30 = vector.load %arg14[%29, %c0_9] : memref<8x16xf32, #tpu.memory_space<vmem>>, vector<8x16xf32>
      tpu.vector_store %arg14[%29, %c0_9], %26 {strides = array<i32>} : memref<8x16xf32, #tpu.memory_space<vmem>>, vector<8x16xf32>,
      %c0_10 = arith.constant 0 : index
      %c0_11 = arith.constant 0 : index
      %31 = vector.load %arg4[%c0_10, %c0_11] : memref<16x32xf32, #tpu.memory_space<vmem>>, vector<16x32xf32>
      %cst = arith.constant dense<0.000000e+00> : vector<8x32xf32>
      %32 = tpu.matmul %26, %31, %cst {dimension_numbers = #tpu.dot_dimension_numbers<[1], [0], [0], [1], [0, 0, 1, 1], [], []>} : vector<8x16xf32>, vector<16x32xf32>, vector<8x32xf32> -> vector<8x32xf32>
      %33 = vector.broadcast %1 : vector<1x32xf32> to vector<8x32xf32>
      %34 = arith.addf %32, %33 : vector<8x32xf32>
      %c0_12 = arith.constant 0 : index
      %c0_13 = arith.constant 0 : index
      %35 = vector.load %arg10[%c0_12, %c0_13] : memref<1x32xf32, #tpu.memory_space<vmem>>, vector<1x32xf32>
      %cst_14 = arith.constant dense<0.000000e+00> : vector<32xf32>
      %36 = vector.multi_reduction <add>, %34, %cst_14 [0] : vector<8x32xf32> to vector<32xf32>
      %37 = vector.shape_cast %36 : vector<32xf32> to vector<1x32xf32>
      %38 = arith.addf %35, %37 : vector<1x32xf32>
      %c0_15 = arith.constant 0 : index
      %c0_16 = arith.constant 0 : index
      %39 = vector.load %arg10[%c0_15, %c0_16] : memref<1x32xf32, #tpu.memory_space<vmem>>, vector<1x32xf32>
      tpu.vector_store %arg10[%c0_15, %c0_16], %38 {strides = array<i32>} : memref<1x32xf32, #tpu.memory_space<vmem>>, vector<1x32xf32>,
      %c0_17 = arith.constant 0 : index
      %c0_18 = arith.constant 0 : index
      %40 = vector.load %arg11[%c0_17, %c0_18] : memref<1x32xf32, #tpu.memory_space<vmem>>, vector<1x32xf32>
      %41 = arith.mulf %34, %34 : vector<8x32xf32>
      %cst_19 = arith.constant dense<0.000000e+00> : vector<32xf32>
      %42 = vector.multi_reduction <add>, %41, %cst_19 [0] : vector<8x32xf32> to vector<32xf32>
      %43 = vector.shape_cast %42 : vector<32xf32> to vector<1x32xf32>
      %44 = arith.addf %40, %43 : vector<1x32xf32>
      %c0_20 = arith.constant 0 : index
      %c0_21 = arith.constant 0 : index
      %45 = vector.load %arg11[%c0_20, %c0_21] : memref<1x32xf32, #tpu.memory_space<vmem>>, vector<1x32xf32>
      tpu.vector_store %arg11[%c0_20, %c0_21], %44 {strides = array<i32>} : memref<1x32xf32, #tpu.memory_space<vmem>>, vector<1x32xf32>,
      %c0_i32_22 = arith.constant 0 : i32
      %46 = arith.cmpi eq, %arg1, %c0_i32_22 : i32
      %47 = arith.extui %46 : i1 to i32
      %c0_i32_23 = arith.constant 0 : i32
      %48 = arith.cmpi ne, %47, %c0_i32_23 : i32
      scf.if %48 {
        %c0_24 = arith.constant 0 : index
        %c0_25 = arith.constant 0 : index
        %49 = vector.load %arg10[%c0_24, %c0_25] : memref<1x32xf32, #tpu.memory_space<vmem>>, vector<1x32xf32>
        %cst_26 = arith.constant 1.250000e-01 : f32
        %50 = vector.broadcast %cst_26 : f32 to vector<1x32xf32>
        %51 = arith.mulf %49, %50 : vector<1x32xf32>
        %c0_27 = arith.constant 0 : index
        %c0_28 = arith.constant 0 : index
        %52 = vector.load %arg11[%c0_27, %c0_28] : memref<1x32xf32, #tpu.memory_space<vmem>>, vector<1x32xf32>
        %cst_29 = arith.constant 1.250000e-01 : f32
        %53 = vector.broadcast %cst_29 : f32 to vector<1x32xf32>
        %54 = arith.mulf %52, %53 : vector<1x32xf32>
        %55 = arith.mulf %51, %51 : vector<1x32xf32>
        %56 = arith.subf %54, %55 : vector<1x32xf32>
        %cst_30 = arith.constant 9.99999974E-6 : f32
        %57 = vector.broadcast %cst_30 : f32 to vector<1x32xf32>
        %58 = arith.addf %56, %57 : vector<1x32xf32>
        %59 = math.rsqrt %58 : vector<1x32xf32>
        %60 = arith.mulf %59, %2 : vector<1x32xf32>
        %c0_31 = arith.constant 0 : index
        %c0_32 = arith.constant 0 : index
        %61 = vector.load %arg10[%c0_31, %c0_32] : memref<1x32xf32, #tpu.memory_space<vmem>>, vector<1x32xf32>
        tpu.vector_store %arg10[%c0_31, %c0_32], %60 {strides = array<i32>} : memref<1x32xf32, #tpu.memory_space<vmem>>, vector<1x32xf32>,
        %62 = arith.mulf %51, %60 : vector<1x32xf32>
        %63 = arith.subf %3, %62 : vector<1x32xf32>
        %c0_33 = arith.constant 0 : index
        %c0_34 = arith.constant 0 : index
        %64 = vector.load %arg11[%c0_33, %c0_34] : memref<1x32xf32, #tpu.memory_space<vmem>>, vector<1x32xf32>
        tpu.vector_store %arg11[%c0_33, %c0_34], %63 {strides = array<i32>} : memref<1x32xf32, #tpu.memory_space<vmem>>, vector<1x32xf32>,
      } else {
      }
    } else {
    }
    %c1_i32 = arith.constant 1 : i32
    %20 = arith.cmpi eq, %arg0, %c1_i32 : i32
    %21 = arith.extui %20 : i1 to i32
    %c0_i32_5 = arith.constant 0 : i32
    %22 = arith.cmpi ne, %21, %c0_i32_5 : i32
    scf.if %22 {
      %c8_i32 = arith.constant 8 : i32
      %26 = arith.muli %arg1, %c8_i32 : i32
      %27 = tpu.assume_multiple %26, 8 : i32
      %28 = arith.index_cast %27 : i32 to index
      %c0_7 = arith.constant 0 : index
      %29 = vector.load %arg14[%28, %c0_7] : memref<8x16xf32, #tpu.memory_space<vmem>>, vector<8x16xf32>
      %c0_8 = arith.constant 0 : index
      %c0_9 = arith.constant 0 : index
      %30 = vector.load %arg4[%c0_8, %c0_9] : memref<16x32xf32, #tpu.memory_space<vmem>>, vector<16x32xf32>
      %cst = arith.constant dense<0.000000e+00> : vector<8x32xf32>
      %31 = tpu.matmul %29, %30, %cst {dimension_numbers = #tpu.dot_dimension_numbers<[1], [0], [0], [1], [0, 0, 1, 1], [], []>} : vector<8x16xf32>, vector<16x32xf32>, vector<8x32xf32> -> vector<8x32xf32>
      %32 = vector.broadcast %1 : vector<1x32xf32> to vector<8x32xf32>
      %33 = arith.addf %31, %32 : vector<8x32xf32>
      %c0_10 = arith.constant 0 : index
      %c0_11 = arith.constant 0 : index
      %34 = vector.load %arg10[%c0_10, %c0_11] : memref<1x32xf32, #tpu.memory_space<vmem>>, vector<1x32xf32>
      %35 = vector.broadcast %34 : vector<1x32xf32> to vector<8x32xf32>
      %36 = arith.mulf %33, %35 : vector<8x32xf32>
      %c0_12 = arith.constant 0 : index
      %c0_13 = arith.constant 0 : index
      %37 = vector.load %arg11[%c0_12, %c0_13] : memref<1x32xf32, #tpu.memory_space<vmem>>, vector<1x32xf32>
      %38 = vector.broadcast %37 : vector<1x32xf32> to vector<8x32xf32>
      %39 = arith.addf %36, %38 : vector<8x32xf32>
      %cst_14 = arith.constant 0.000000e+00 : f32
      %40 = vector.broadcast %cst_14 : f32 to vector<8x32xf32>
      %41 = arith.maximumf %39, %40 : vector<8x32xf32>
      %c0_15 = arith.constant 0 : index
      %c0_16 = arith.constant 0 : index
      %42 = vector.load %arg5[%c0_15, %c0_16] : memref<32x16xf32, #tpu.memory_space<vmem>>, vector<32x16xf32>
      %cst_17 = arith.constant dense<0.000000e+00> : vector<8x16xf32>
      %43 = tpu.matmul %41, %42, %cst_17 {dimension_numbers = #tpu.dot_dimension_numbers<[1], [0], [0], [1], [0, 0, 1, 1], [], []>} : vector<8x32xf32>, vector<32x16xf32>, vector<8x16xf32> -> vector<8x16xf32>
      %44 = vector.broadcast %4 : vector<1x16xf32> to vector<8x16xf32>
      %45 = arith.addf %43, %44 : vector<8x16xf32>
      %c0_18 = arith.constant 0 : index
      %c0_19 = arith.constant 0 : index
      %46 = vector.load %arg12[%c0_18, %c0_19] : memref<1x16xf32, #tpu.memory_space<vmem>>, vector<1x16xf32>
      %cst_20 = arith.constant dense<0.000000e+00> : vector<16xf32>
      %47 = vector.multi_reduction <add>, %45, %cst_20 [0] : vector<8x16xf32> to vector<16xf32>
      %48 = vector.shape_cast %47 : vector<16xf32> to vector<1x16xf32>
      %49 = arith.addf %46, %48 : vector<1x16xf32>
      %c0_21 = arith.constant 0 : index
      %c0_22 = arith.constant 0 : index
      %50 = vector.load %arg12[%c0_21, %c0_22] : memref<1x16xf32, #tpu.memory_space<vmem>>, vector<1x16xf32>
      tpu.vector_store %arg12[%c0_21, %c0_22], %49 {strides = array<i32>} : memref<1x16xf32, #tpu.memory_space<vmem>>, vector<1x16xf32>,
      %c0_23 = arith.constant 0 : index
      %c0_24 = arith.constant 0 : index
      %51 = vector.load %arg13[%c0_23, %c0_24] : memref<1x16xf32, #tpu.memory_space<vmem>>, vector<1x16xf32>
      %52 = arith.mulf %45, %45 : vector<8x16xf32>
      %cst_25 = arith.constant dense<0.000000e+00> : vector<16xf32>
      %53 = vector.multi_reduction <add>, %52, %cst_25 [0] : vector<8x16xf32> to vector<16xf32>
      %54 = vector.shape_cast %53 : vector<16xf32> to vector<1x16xf32>
      %55 = arith.addf %51, %54 : vector<1x16xf32>
      %c0_26 = arith.constant 0 : index
      %c0_27 = arith.constant 0 : index
      %56 = vector.load %arg13[%c0_26, %c0_27] : memref<1x16xf32, #tpu.memory_space<vmem>>, vector<1x16xf32>
      tpu.vector_store %arg13[%c0_26, %c0_27], %55 {strides = array<i32>} : memref<1x16xf32, #tpu.memory_space<vmem>>, vector<1x16xf32>,
      %c0_i32_28 = arith.constant 0 : i32
      %57 = arith.cmpi eq, %arg1, %c0_i32_28 : i32
      %58 = arith.extui %57 : i1 to i32
      %c0_i32_29 = arith.constant 0 : i32
      %59 = arith.cmpi ne, %58, %c0_i32_29 : i32
      scf.if %59 {
        %c0_30 = arith.constant 0 : index
        %c0_31 = arith.constant 0 : index
        %60 = vector.load %arg12[%c0_30, %c0_31] : memref<1x16xf32, #tpu.memory_space<vmem>>, vector<1x16xf32>
        %cst_32 = arith.constant 1.250000e-01 : f32
        %61 = vector.broadcast %cst_32 : f32 to vector<1x16xf32>
        %62 = arith.mulf %60, %61 : vector<1x16xf32>
        %c0_33 = arith.constant 0 : index
        %c0_34 = arith.constant 0 : index
        %63 = vector.load %arg13[%c0_33, %c0_34] : memref<1x16xf32, #tpu.memory_space<vmem>>, vector<1x16xf32>
        %cst_35 = arith.constant 1.250000e-01 : f32
        %64 = vector.broadcast %cst_35 : f32 to vector<1x16xf32>
        %65 = arith.mulf %63, %64 : vector<1x16xf32>
        %66 = arith.mulf %62, %62 : vector<1x16xf32>
        %67 = arith.subf %65, %66 : vector<1x16xf32>
        %cst_36 = arith.constant 9.99999974E-6 : f32
        %68 = vector.broadcast %cst_36 : f32 to vector<1x16xf32>
        %69 = arith.addf %67, %68 : vector<1x16xf32>
        %70 = math.rsqrt %69 : vector<1x16xf32>
        %71 = arith.mulf %70, %5 : vector<1x16xf32>
        %c0_37 = arith.constant 0 : index
        %c0_38 = arith.constant 0 : index
        %72 = vector.load %arg12[%c0_37, %c0_38] : memref<1x16xf32, #tpu.memory_space<vmem>>, vector<1x16xf32>
        tpu.vector_store %arg12[%c0_37, %c0_38], %71 {strides = array<i32>} : memref<1x16xf32, #tpu.memory_space<vmem>>, vector<1x16xf32>,
        %73 = arith.mulf %62, %71 : vector<1x16xf32>
        %74 = arith.subf %6, %73 : vector<1x16xf32>
        %c0_39 = arith.constant 0 : index
        %c0_40 = arith.constant 0 : index
        %75 = vector.load %arg13[%c0_39, %c0_40] : memref<1x16xf32, #tpu.memory_space<vmem>>, vector<1x16xf32>
        tpu.vector_store %arg13[%c0_39, %c0_40], %74 {strides = array<i32>} : memref<1x16xf32, #tpu.memory_space<vmem>>, vector<1x16xf32>,
      } else {
      }
    } else {
    }
    %c2_i32 = arith.constant 2 : i32
    %23 = arith.cmpi eq, %arg0, %c2_i32 : i32
    %24 = arith.extui %23 : i1 to i32
    %c0_i32_6 = arith.constant 0 : i32
    %25 = arith.cmpi ne, %24, %c0_i32_6 : i32
    scf.if %25 {
      %c8_i32 = arith.constant 8 : i32
      %26 = arith.muli %arg1, %c8_i32 : i32
      %27 = tpu.assume_multiple %26, 8 : i32
      %28 = arith.index_cast %27 : i32 to index
      %c0_7 = arith.constant 0 : index
      %29 = vector.load %arg14[%28, %c0_7] : memref<8x16xf32, #tpu.memory_space<vmem>>, vector<8x16xf32>
      %c0_8 = arith.constant 0 : index
      %c0_9 = arith.constant 0 : index
      %30 = vector.load %arg4[%c0_8, %c0_9] : memref<16x32xf32, #tpu.memory_space<vmem>>, vector<16x32xf32>
      %cst = arith.constant dense<0.000000e+00> : vector<8x32xf32>
      %31 = tpu.matmul %29, %30, %cst {dimension_numbers = #tpu.dot_dimension_numbers<[1], [0], [0], [1], [0, 0, 1, 1], [], []>} : vector<8x16xf32>, vector<16x32xf32>, vector<8x32xf32> -> vector<8x32xf32>
      %32 = vector.broadcast %1 : vector<1x32xf32> to vector<8x32xf32>
      %33 = arith.addf %31, %32 : vector<8x32xf32>
      %c0_10 = arith.constant 0 : index
      %c0_11 = arith.constant 0 : index
      %34 = vector.load %arg10[%c0_10, %c0_11] : memref<1x32xf32, #tpu.memory_space<vmem>>, vector<1x32xf32>
      %35 = vector.broadcast %34 : vector<1x32xf32> to vector<8x32xf32>
      %36 = arith.mulf %33, %35 : vector<8x32xf32>
      %c0_12 = arith.constant 0 : index
      %c0_13 = arith.constant 0 : index
      %37 = vector.load %arg11[%c0_12, %c0_13] : memref<1x32xf32, #tpu.memory_space<vmem>>, vector<1x32xf32>
      %38 = vector.broadcast %37 : vector<1x32xf32> to vector<8x32xf32>
      %39 = arith.addf %36, %38 : vector<8x32xf32>
      %cst_14 = arith.constant 0.000000e+00 : f32
      %40 = vector.broadcast %cst_14 : f32 to vector<8x32xf32>
      %41 = arith.maximumf %39, %40 : vector<8x32xf32>
      %c0_15 = arith.constant 0 : index
      %c0_16 = arith.constant 0 : index
      %42 = vector.load %arg5[%c0_15, %c0_16] : memref<32x16xf32, #tpu.memory_space<vmem>>, vector<32x16xf32>
      %cst_17 = arith.constant dense<0.000000e+00> : vector<8x16xf32>
      %43 = tpu.matmul %41, %42, %cst_17 {dimension_numbers = #tpu.dot_dimension_numbers<[1], [0], [0], [1], [0, 0, 1, 1], [], []>} : vector<8x32xf32>, vector<32x16xf32>, vector<8x16xf32> -> vector<8x16xf32>
      %44 = vector.broadcast %4 : vector<1x16xf32> to vector<8x16xf32>
      %45 = arith.addf %43, %44 : vector<8x16xf32>
      %c0_18 = arith.constant 0 : index
      %c0_19 = arith.constant 0 : index
      %46 = vector.load %arg12[%c0_18, %c0_19] : memref<1x16xf32, #tpu.memory_space<vmem>>, vector<1x16xf32>
      %47 = vector.broadcast %46 : vector<1x16xf32> to vector<8x16xf32>
      %48 = arith.mulf %45, %47 : vector<8x16xf32>
      %c0_20 = arith.constant 0 : index
      %c0_21 = arith.constant 0 : index
      %49 = vector.load %arg13[%c0_20, %c0_21] : memref<1x16xf32, #tpu.memory_space<vmem>>, vector<1x16xf32>
      %50 = vector.broadcast %49 : vector<1x16xf32> to vector<8x16xf32>
      %51 = arith.addf %48, %50 : vector<8x16xf32>
      %cst_22 = arith.constant 0.000000e+00 : f32
      %52 = vector.broadcast %cst_22 : f32 to vector<8x16xf32>
      %53 = arith.maximumf %51, %52 : vector<8x16xf32>
      %c0_23 = arith.constant 0 : index
      %c0_24 = arith.constant 0 : index
      %54 = vector.load %arg6[%c0_23, %c0_24] : memref<16x8xf32, #tpu.memory_space<vmem>>, vector<16x8xf32>
      %cst_25 = arith.constant dense<0.000000e+00> : vector<8x8xf32>
      %55 = tpu.matmul %53, %54, %cst_25 {dimension_numbers = #tpu.dot_dimension_numbers<[1], [0], [0], [1], [0, 0, 1, 1], [], []>} : vector<8x16xf32>, vector<16x8xf32>, vector<8x8xf32> -> vector<8x8xf32>
      %56 = vector.broadcast %7 : vector<1x8xf32> to vector<8x8xf32>
      %57 = arith.addf %55, %56 : vector<8x8xf32>
      %58 = arith.negf %57 : vector<8x8xf32>
      %59 = math.exp %58 : vector<8x8xf32>
      %cst_26 = arith.constant 1.000000e+00 : f32
      %60 = vector.broadcast %cst_26 : f32 to vector<8x8xf32>
      %61 = arith.addf %60, %59 : vector<8x8xf32>
      %62 = arith.divf %60, %61 : vector<8x8xf32>
      %c0_27 = arith.constant 0 : index
      %c0_28 = arith.constant 0 : index
      %63 = vector.load %arg7[%c0_27, %c0_28] : memref<8x16xf32, #tpu.memory_space<vmem>>, vector<8x16xf32>
      %cst_29 = arith.constant dense<0.000000e+00> : vector<8x16xf32>
      %64 = tpu.matmul %62, %63, %cst_29 {dimension_numbers = #tpu.dot_dimension_numbers<[1], [0], [0], [1], [0, 0, 1, 1], [], []>} : vector<8x8xf32>, vector<8x16xf32>, vector<8x16xf32> -> vector<8x16xf32>
      %c0_30 = arith.constant 0 : index
      %c0_31 = arith.constant 0 : index
      %65 = vector.load %arg3[%c0_30, %c0_31] : memref<8x1xf32, #tpu.memory_space<vmem>>, vector<8x1xf32>
      %66 = vector.broadcast %65 : vector<8x1xf32> to vector<8x16xf32>
      %67 = vector.broadcast %9 : vector<1x16xf32> to vector<8x16xf32>
      %68 = arith.mulf %66, %67 : vector<8x16xf32>
      %69 = arith.addf %64, %68 : vector<8x16xf32>
      %70 = vector.broadcast %8 : vector<1x16xf32> to vector<8x16xf32>
      %71 = arith.addf %69, %70 : vector<8x16xf32>
      %cst_32 = arith.constant 0.000000e+00 : f32
      %72 = vector.broadcast %cst_32 : f32 to vector<8x16xf32>
      %73 = arith.maximumf %71, %72 : vector<8x16xf32>
      %74 = vector.broadcast %10 : vector<1x16xf32> to vector<8x16xf32>
      %75 = arith.mulf %73, %74 : vector<8x16xf32>
      %cst_33 = arith.constant dense<0.000000e+00> : vector<8xf32>
      %76 = vector.multi_reduction <add>, %75, %cst_33 [1] : vector<8x16xf32> to vector<8xf32>
      %77 = vector.shape_cast %76 : vector<8xf32> to vector<8x1xf32>
      %78 = vector.broadcast %11 : vector<1x1xf32> to vector<8x1xf32>
      %79 = arith.addf %77, %78 : vector<8x1xf32>
      %80 = tpu.concatenate %62, %79 in 1 : vector<8x8xf32>, vector<8x1xf32> -> vector<8x9xf32>
      %c0_34 = arith.constant 0 : index
      %c0_35 = arith.constant 0 : index
      %81 = vector.load %arg9[%c0_34, %c0_35] : memref<8x9xf32, #tpu.memory_space<vmem>>, vector<8x9xf32>
      tpu.vector_store %arg9[%c0_34, %c0_35], %80 {strides = array<i32>} : memref<8x9xf32, #tpu.memory_space<vmem>>, vector<8x9xf32>,
    } else {
    }
    return
  }
  func.func @transform_0(%arg0: i32, %arg1: i32) -> (i32, i32) {
    %c0_i32 = arith.constant 0 : i32
    %0 = arith.cmpi eq, %arg0, %c0_i32 : i32
    %c0_i32_0 = arith.constant 0 : i32
    %1 = arith.select %0, %arg1, %c0_i32_0 : i32
    %c0_i32_1 = arith.constant 0 : i32
    %c0_i32_2 = arith.constant 0 : i32
    return %1, %c0_i32_1 : i32, i32
  }
  func.func @transform_1(%arg0: i32, %arg1: i32) -> (i32, i32) {
    %c2_i32 = arith.constant 2 : i32
    %0 = arith.cmpi eq, %arg0, %c2_i32 : i32
    %c0_i32 = arith.constant 0 : i32
    %1 = arith.select %0, %arg1, %c0_i32 : i32
    %c0_i32_0 = arith.constant 0 : i32
    %c0_i32_1 = arith.constant 0 : i32
    return %1, %c0_i32_0 : i32, i32
  }
  func.func @transform_2(%arg0: i32, %arg1: i32) -> (i32, i32) {
    %c0_i32 = arith.constant 0 : i32
    %c0_i32_0 = arith.constant 0 : i32
    %c0_i32_1 = arith.constant 0 : i32
    return %c0_i32, %c0_i32_0 : i32, i32
  }
  func.func @transform_3(%arg0: i32, %arg1: i32) -> (i32, i32) {
    %c0_i32 = arith.constant 0 : i32
    %c0_i32_0 = arith.constant 0 : i32
    %c0_i32_1 = arith.constant 0 : i32
    return %c0_i32, %c0_i32_0 : i32, i32
  }
  func.func @transform_4(%arg0: i32, %arg1: i32) -> (i32, i32) {
    %c0_i32 = arith.constant 0 : i32
    %c0_i32_0 = arith.constant 0 : i32
    %c0_i32_1 = arith.constant 0 : i32
    return %c0_i32, %c0_i32_0 : i32, i32
  }
  func.func @transform_5(%arg0: i32, %arg1: i32) -> (i32, i32) {
    %c0_i32 = arith.constant 0 : i32
    %c0_i32_0 = arith.constant 0 : i32
    %c0_i32_1 = arith.constant 0 : i32
    return %c0_i32, %c0_i32_0 : i32, i32
  }
  func.func @transform_6(%arg0: i32, %arg1: i32) -> (i32, i32) {
    %c0_i32 = arith.constant 0 : i32
    %c0_i32_0 = arith.constant 0 : i32
    %c0_i32_1 = arith.constant 0 : i32
    return %c0_i32, %c0_i32_0 : i32, i32
  }
  func.func @transform_7(%arg0: i32, %arg1: i32) -> (i32, i32) {
    %c2_i32 = arith.constant 2 : i32
    %0 = arith.cmpi eq, %arg0, %c2_i32 : i32
    %c0_i32 = arith.constant 0 : i32
    %1 = arith.select %0, %arg1, %c0_i32 : i32
    %c0_i32_0 = arith.constant 0 : i32
    %c0_i32_1 = arith.constant 0 : i32
    return %1, %c0_i32_0 : i32, i32
  }
}

</mosaic_0001>

<llo_original>
// kernel: tpu_custom_call.1
$region0: #{tpu_custom_call.1}
  #allocation0 [shape = 'u32[]', space=smem, size = 0x4, offset = 0x4, fixed_abs, tag = 'smem constant byte address 0x4 - core index']
  #allocation1 [shape = 'u32[144,128]{1,0:T(1,128)}', space=vmem, size = 0x12000, scoped, tag = 'internal scratch']
  #allocation2 [shape = 'f32[1,32]{1,0:T(1,128)}', space=vmem, size = 0x200, scoped, tag = 'scratch operand']
  #allocation3 [shape = 'f32[1,32]{1,0:T(1,128)}', space=vmem, size = 0x200, scoped, tag = 'scratch operand']
  #allocation4 [shape = 'f32[1,16]{1,0:T(1,128)}', space=vmem, size = 0x200, scoped, tag = 'scratch operand']
  #allocation5 [shape = 'f32[1,16]{1,0:T(1,128)}', space=vmem, size = 0x200, scoped, tag = 'scratch operand']
  #allocation6 [shape = 'f32[8,16]{1,0:T(8,128)}', space=vmem, size = 0x1000, scoped, tag = 'scratch operand']
  %s0 = inlined_call_operand.vmem [shape: f32[8,16], index: 0, kind: input, shape index: {}]
  %s1 = inlined_call_operand.vmem [shape: f32[8,1], index: 1, kind: input, shape index: {}]
  %s2 = inlined_call_operand.vmem [shape: f32[16,32], index: 2, kind: input, shape index: {}]
  %s3 = inlined_call_operand.vmem [shape: f32[32,16], index: 3, kind: input, shape index: {}]
  %s4 = inlined_call_operand.vmem [shape: f32[16,8], index: 4, kind: input, shape index: {}]
  %s5 = inlined_call_operand.vmem [shape: f32[8,16], index: 5, kind: input, shape index: {}]
  %s6 = inlined_call_operand.vmem [shape: f32[11,32], index: 6, kind: input, shape index: {}]
  %s7 = inlined_call_operand.hbm [shape: f32[8,9], index: 7, kind: output, shape index: {}]
  %s8 = sld [smem:[#allocation0]]
  $region85: #{tpu_custom_call.1} parent=0
    _
  %s10 = ssub.s32 1, %s8
  %s11 = scalar_select 0, %s10, %s8
  $region1: #{tpu_custom_call.1} parent=0
    #allocation7 [shape = 'u8[8192]{0}', space=vmem, size = 0x2000, scoped, tag = 'output window, operand 0']
    #allocation8 [shape = 's32[2]{0}', space=sflag, size = 0x8, scoped, tag = 'scoped memory for tpu_custom_call.1']
    %12 = vsyncpa [#allocation8], 0
    %s13 = scalar_lea.sflag [#allocation8], 1
    %14 = vsyncpa %s13, 0
    loop: start=0, step=1, limit=5
    $region2: #{tpu_custom_call.1} parent=1 // loop_pre_header
      _
    $region3: #{tpu_custom_call.1} parent=1 // loop_header
      %s16 = sphi 0, %s20
      %p17 = scmp.ge.s32.totalorder %s16, 5
      %s23 = sphi 0, %s35
      %s24 = sphi 0, %s31
      %s25 = sphi 0, %s23
      %s26 = sphi 0, %s24
      %s27 = sphi 0, %s25
      %s28 = sphi 0, %s26
      %s42 = sphi 0, %s44
      %s45 = sphi 0, %s42
      %s46 = sphi 0, %s45
      %s62 = sphi 0, %s46
      %s72 = sphi 0, %s74
      %s75 = sphi 0, %s72
      %s76 = sphi 0, %s75
      %s92 = sphi 0, %s76
      %s96 = sphi 0, %s96
      %s98 = sphi 0, %s96
      %s99 = sphi 0, %s98
      %s113 = sphi 0, %s99
      %s117 = sphi 0, %s117
      %s119 = sphi 0, %s117
      %s120 = sphi 0, %s119
      %s134 = sphi 0, %s120
      %s138 = sphi 0, %s138
      %s140 = sphi 0, %s138
      %s141 = sphi 0, %s140
      %s155 = sphi 0, %s141
      %s159 = sphi 0, %s159
      %s161 = sphi 0, %s159
      %s162 = sphi 0, %s161
      %s176 = sphi 0, %s162
      %s180 = sphi 0, %s180
      %s182 = sphi 0, %s180
      %s183 = sphi 0, %s182
      %s197 = sphi 0, %s183
      %s207 = sphi 0, %s209
      %s210 = sphi 0, %s207
      %s211 = sphi 0, %s210
      %s227 = sphi 0, %s211
    $region4: #{tpu_custom_call.1} parent=1 // loop_header_branch
      %19 = sbr.rel (%p17) target = $region8
    $region5: #{tpu_custom_call.1} parent=1 // loop_body
      %s21 = ssub.s32 %s16, 1
      %s22 = ssub.s32 %s16, 2
      %s29 = sadd.s32 1, %s24
      %p30 = scmp.ge.s32.totalorder %s29, 1
      %s31 = scalar_select %p30, 0, %s29
      %s32 = sadd.s32 1, %s23
      %s33 = scalar_select %p30, %s32, %s23
      %p34 = scmp.ge.s32.totalorder %s33, 3
      %s35 = scalar_select %p34, 0, %s33
      %p36 = scmp.eq.s32.totalorder %s23, 0
      %s37 = scalar_select %p36, %s24, 0
      %p38 = scmp.eq.s32.totalorder %s35, 0
      %s39 = scalar_select %p38, %s31, 0
      %s40 = ssub.s32 %s37, %s39
      %p41 = scmp.eq.s32.totalorder %s40, 0
      %s43 = sadd.s32 %s42, 1
      %s44 = scalar_select %p41, %s42, %s43
      %p47 = pneg %p41
      %p48 = scmp.eq.s32.totalorder %s16, 2
      %p49 = por %p47, %p48
      %p50 = scmp.ne.s32.totalorder %s42, %s45
      %p51 = scmp.eq.s32.totalorder %s16, 0
      %p52 = por %p50, %p51
      %p53 = scmp.ne.s32.totalorder %s42, %s45
      %p54 = scmp.eq.s32.totalorder %s21, 2
      %p55 = por %p53, %p54
      %p56 = scmp.ne.s32.totalorder %s45, %s46
      %p57 = scmp.eq.s32.totalorder %s21, 0
      %p58 = por %p56, %p57
      %p59 = scmp.ne.s32.totalorder %s45, %s46
      %p60 = scmp.eq.s32.totalorder %s22, 2
      %p61 = por %p59, %p60
      %p63 = scmp.ne.s32.totalorder %s46, %s62
      %p64 = scmp.eq.s32.totalorder %s22, 0
      %p65 = por %p63, %p64
      %p66 = scmp.eq.s32.totalorder %s23, 2
      %s67 = scalar_select %p66, %s24, 0
      %p68 = scmp.eq.s32.totalorder %s35, 2
      %s69 = scalar_select %p68, %s31, 0
      %s70 = ssub.s32 %s67, %s69
      %p71 = scmp.eq.s32.totalorder %s70, 0
      %s73 = sadd.s32 %s72, 1
      %s74 = scalar_select %p71, %s72, %s73
      %p77 = pneg %p71
      %p78 = scmp.eq.s32.totalorder %s16, 2
      %p79 = por %p77, %p78
      %p80 = scmp.ne.s32.totalorder %s72, %s75
      %p81 = scmp.eq.s32.totalorder %s16, 0
      %p82 = por %p80, %p81
      %p83 = scmp.ne.s32.totalorder %s72, %s75
      %p84 = scmp.eq.s32.totalorder %s21, 2
      %p85 = por %p83, %p84
      %p86 = scmp.ne.s32.totalorder %s75, %s76
      %p87 = scmp.eq.s32.totalorder %s21, 0
      %p88 = por %p86, %p87
      %p89 = scmp.ne.s32.totalorder %s75, %s76
      %p90 = scmp.eq.s32.totalorder %s22, 2
      %p91 = por %p89, %p90
      %p93 = scmp.ne.s32.totalorder %s76, %s92
      %p94 = scmp.eq.s32.totalorder %s22, 0
      %p95 = por %p93, %p94
      %s97 = sadd.s32 %s96, 1
      %p100 = scmp.eq.s32.totalorder %s16, 2
      %p101 = scmp.ne.s32.totalorder %s96, %s98
      %p102 = scmp.eq.s32.totalorder %s16, 0
      %p103 = por %p101, %p102
      %p104 = scmp.ne.s32.totalorder %s96, %s98
      %p105 = scmp.eq.s32.totalorder %s21, 2
      %p106 = por %p104, %p105
      %p107 = scmp.ne.s32.totalorder %s98, %s99
      %p108 = scmp.eq.s32.totalorder %s21, 0
      %p109 = por %p107, %p108
      %p110 = scmp.ne.s32.totalorder %s98, %s99
      %p111 = scmp.eq.s32.totalorder %s22, 2
      %p112 = por %p110, %p111
      %p114 = scmp.ne.s32.totalorder %s99, %s113
      %p115 = scmp.eq.s32.totalorder %s22, 0
      %p116 = por %p114, %p115
      %s118 = sadd.s32 %s117, 1
      %p121 = scmp.eq.s32.totalorder %s16, 2
      %p122 = scmp.ne.s32.totalorder %s117, %s119
      %p123 = scmp.eq.s32.totalorder %s16, 0
      %p124 = por %p122, %p123
      %p125 = scmp.ne.s32.totalorder %s117, %s119
      %p126 = scmp.eq.s32.totalorder %s21, 2
      %p127 = por %p125, %p126
      %p128 = scmp.ne.s32.totalorder %s119, %s120
      %p129 = scmp.eq.s32.totalorder %s21, 0
      %p130 = por %p128, %p129
      %p131 = scmp.ne.s32.totalorder %s119, %s120
      %p132 = scmp.eq.s32.totalorder %s22, 2
      %p133 = por %p131, %p132
      %p135 = scmp.ne.s32.totalorder %s120, %s134
      %p136 = scmp.eq.s32.totalorder %s22, 0
      %p137 = por %p135, %p136
      %s139 = sadd.s32 %s138, 1
      %p142 = scmp.eq.s32.totalorder %s16, 2
      %p143 = scmp.ne.s32.totalorder %s138, %s140
      %p144 = scmp.eq.s32.totalorder %s16, 0
      %p145 = por %p143, %p144
      %p146 = scmp.ne.s32.totalorder %s138, %s140
      %p147 = scmp.eq.s32.totalorder %s21, 2
      %p148 = por %p146, %p147
      %p149 = scmp.ne.s32.totalorder %s140, %s141
      %p150 = scmp.eq.s32.totalorder %s21, 0
      %p151 = por %p149, %p150
      %p152 = scmp.ne.s32.totalorder %s140, %s141
      %p153 = scmp.eq.s32.totalorder %s22, 2
      %p154 = por %p152, %p153
      %p156 = scmp.ne.s32.totalorder %s141, %s155
      %p157 = scmp.eq.s32.totalorder %s22, 0
      %p158 = por %p156, %p157
      %s160 = sadd.s32 %s159, 1
      %p163 = scmp.eq.s32.totalorder %s16, 2
      %p164 = scmp.ne.s32.totalorder %s159, %s161
      %p165 = scmp.eq.s32.totalorder %s16, 0
      %p166 = por %p164, %p165
      %p167 = scmp.ne.s32.totalorder %s159, %s161
      %p168 = scmp.eq.s32.totalorder %s21, 2
      %p169 = por %p167, %p168
      %p170 = scmp.ne.s32.totalorder %s161, %s162
      %p171 = scmp.eq.s32.totalorder %s21, 0
      %p172 = por %p170, %p171
      %p173 = scmp.ne.s32.totalorder %s161, %s162
      %p174 = scmp.eq.s32.totalorder %s22, 2
      %p175 = por %p173, %p174
      %p177 = scmp.ne.s32.totalorder %s162, %s176
      %p178 = scmp.eq.s32.totalorder %s22, 0
      %p179 = por %p177, %p178
      %s181 = sadd.s32 %s180, 1
      %p184 = scmp.eq.s32.totalorder %s16, 2
      %p185 = scmp.ne.s32.totalorder %s180, %s182
      %p186 = scmp.eq.s32.totalorder %s16, 0
      %p187 = por %p185, %p186
      %p188 = scmp.ne.s32.totalorder %s180, %s182
      %p189 = scmp.eq.s32.totalorder %s21, 2
      %p190 = por %p188, %p189
      %p191 = scmp.ne.s32.totalorder %s182, %s183
      %p192 = scmp.eq.s32.totalorder %s21, 0
      %p193 = por %p191, %p192
      %p194 = scmp.ne.s32.totalorder %s182, %s183
      %p195 = scmp.eq.s32.totalorder %s22, 2
      %p196 = por %p194, %p195
      %p198 = scmp.ne.s32.totalorder %s183, %s197
      %p199 = scmp.eq.s32.totalorder %s22, 0
      %p200 = por %p198, %p199
      %p201 = scmp.eq.s32.totalorder %s23, 2
      %s202 = scalar_select %p201, %s24, 0
      %p203 = scmp.eq.s32.totalorder %s35, 2
      %s204 = scalar_select %p203, %s31, 0
      %s205 = ssub.s32 %s202, %s204
      %p206 = scmp.eq.s32.totalorder %s205, 0
      %s208 = sadd.s32 %s207, 1
      %s209 = scalar_select %p206, %s207, %s208
      %p212 = pneg %p206
      %p213 = scmp.eq.s32.totalorder %s16, 2
      %p214 = por %p212, %p213
      %p215 = scmp.ne.s32.totalorder %s207, %s210
      %p216 = scmp.eq.s32.totalorder %s16, 0
      %p217 = por %p215, %p216
      %p218 = scmp.ne.s32.totalorder %s207, %s210
      %p219 = scmp.eq.s32.totalorder %s21, 2
      %p220 = por %p218, %p219
      %p221 = scmp.ne.s32.totalorder %s210, %s211
      %p222 = scmp.eq.s32.totalorder %s21, 0
      %p223 = por %p221, %p222
      %p224 = scmp.ne.s32.totalorder %s210, %s211
      %p225 = scmp.eq.s32.totalorder %s22, 2
      %p226 = por %p224, %p225
      %p228 = scmp.ne.s32.totalorder %s211, %s227
      %p229 = scmp.eq.s32.totalorder %s22, 0
      %p230 = por %p228, %p229
      %p231 = scmp.le.s32.totalorder 1, %s16
      %p232 = scmp.lt.s32.totalorder %s16, 4
      %p233 = pnand %p231, %p232
      %p234 = pneg %p233
      // Predicated region
      $region9: #{tpu_custom_call.1} parent=5 // pred_check
        _
      $region10: #{tpu_custom_call.1} parent=5 // pred_check_branch
        %236 = sbr.rel (%p233) target = $region12
      $region11: #{tpu_custom_call.1} parent=5 // pred_region
        %s237 = ssub.s32 %s16, 1
        // Predicated region
        $region13: #{tpu_custom_call.1} parent=11 // pred_check
          %p238 = pneg %p109
        $region14: #{tpu_custom_call.1} parent=11 // pred_check_branch
          %240 = sbr.rel (%p238) target = $region16
        $region15: #{tpu_custom_call.1} parent=11 // pred_region
          _
        $region16: #{tpu_custom_call.1} parent=11 // pred_fallthru
          _
        // Predicated region
        $region17: #{tpu_custom_call.1} parent=11 // pred_check
          %p241 = pneg %p130
        $region18: #{tpu_custom_call.1} parent=11 // pred_check_branch
          %243 = sbr.rel (%p241) target = $region20
        $region19: #{tpu_custom_call.1} parent=11 // pred_region
          _
        $region20: #{tpu_custom_call.1} parent=11 // pred_fallthru
          _
        // Predicated region
        $region21: #{tpu_custom_call.1} parent=11 // pred_check
          %p244 = pneg %p151
        $region22: #{tpu_custom_call.1} parent=11 // pred_check_branch
          %246 = sbr.rel (%p244) target = $region24
        $region23: #{tpu_custom_call.1} parent=11 // pred_region
          _
        $region24: #{tpu_custom_call.1} parent=11 // pred_fallthru
          _
        // Predicated region
        $region25: #{tpu_custom_call.1} parent=11 // pred_check
          %p247 = pneg %p172
        $region26: #{tpu_custom_call.1} parent=11 // pred_check_branch
          %249 = sbr.rel (%p247) target = $region28
        $region27: #{tpu_custom_call.1} parent=11 // pred_region
          _
        $region28: #{tpu_custom_call.1} parent=11 // pred_fallthru
          _
        // Predicated region
        $region29: #{tpu_custom_call.1} parent=11 // pred_check
          %p250 = pneg %p193
        $region30: #{tpu_custom_call.1} parent=11 // pred_check_branch
          %252 = sbr.rel (%p250) target = $region32
        $region31: #{tpu_custom_call.1} parent=11 // pred_region
          _
        $region32: #{tpu_custom_call.1} parent=11 // pred_fallthru
          _
      $region12: #{tpu_custom_call.1} parent=5 // pred_fallthru
        _
      %p253 = scmp.lt.s32.totalorder %s16, 3
      // Predicated region
      $region33: #{tpu_custom_call.1} parent=5 // pred_check
        %p254 = pneg %p253
      $region34: #{tpu_custom_call.1} parent=5 // pred_check_branch
        %256 = sbr.rel (%p254) target = $region36
      $region35: #{tpu_custom_call.1} parent=5 // pred_region
        // Predicated region
        $region37: #{tpu_custom_call.1} parent=35 // pred_check
          %p257 = pneg %p52
        $region38: #{tpu_custom_call.1} parent=35 // pred_check_branch
          %259 = sbr.rel (%p257) target = $region40
        $region39: #{tpu_custom_call.1} parent=35 // pred_region
          %p260 = scmp.eq.s32.totalorder %s23, 0
          %s261 = scalar_select %p260, %s24, 0
          %p262 = scmp.lt.s32.totalorder %s261, 0
          %s263 = scalar_select %p262, %s261, 0
          %s264 = smul.addr %s263, 8
          %s265 = scalar_lea.vmem %s0, %s264
          %p266 = scmp.eq.s32.totalorder %s23, 0
          %s267 = scalar_select %p266, %s24, 0
        $region40: #{tpu_custom_call.1} parent=35 // pred_fallthru
          _
        // Predicated region
        $region41: #{tpu_custom_call.1} parent=35 // pred_check
          %p268 = pneg %p82
        $region42: #{tpu_custom_call.1} parent=35 // pred_check_branch
          %270 = sbr.rel (%p268) target = $region44
        $region43: #{tpu_custom_call.1} parent=35 // pred_region
          %p271 = scmp.eq.s32.totalorder %s23, 2
          %s272 = scalar_select %p271, %s24, 0
          %p273 = scmp.lt.s32.totalorder %s272, 0
          %s274 = scalar_select %p273, %s272, 0
          %s275 = smul.addr %s274, 8
          %s276 = scalar_lea.vmem %s1, %s275
          %p277 = scmp.eq.s32.totalorder %s23, 2
          %s278 = scalar_select %p277, %s24, 0
        $region44: #{tpu_custom_call.1} parent=35 // pred_fallthru
          _
      $region36: #{tpu_custom_call.1} parent=5 // pred_fallthru
        _
      %p279 = scmp.le.s32.totalorder 1, %s16
      %p280 = scmp.lt.s32.totalorder %s16, 4
      %p281 = pnand %p279, %p280
      %p282 = pneg %p281
      // Predicated region
      $region45: #{tpu_custom_call.1} parent=5 // pred_check
        _
      $region46: #{tpu_custom_call.1} parent=5 // pred_check_branch
        %284 = sbr.rel (%p281) target = $region48
      $region47: #{tpu_custom_call.1} parent=5 // pred_region
        %s285 = ssub.s32 %s16, 1
        %p286 = scmp.eq.s32.totalorder %s25, 0
        %s287 = scalar_select %p286, %s26, 0
        %p288 = scmp.lt.s32.totalorder %s287, 0
        %s289 = scalar_select %p288, %s287, 0
        %s290 = smul.addr %s289, 8
        %s291 = scalar_lea.vmem %s0, %s290
        %p292 = pneg %p58
        %p293 = pneg %p55
        %p294 = scmp.eq.s32.totalorder %s25, 2
        %s295 = scalar_select %p294, %s26, 0
        %p296 = scmp.lt.s32.totalorder %s295, 0
        %s297 = scalar_select %p296, %s295, 0
        %s298 = smul.addr %s297, 8
        %s299 = scalar_lea.vmem %s1, %s298
        %p300 = pneg %p88
        %p301 = pneg %p85
        %p302 = pneg %p109
        %p303 = pneg %p106
        %p304 = pneg %p130
        %p305 = pneg %p127
        %p306 = pneg %p151
        %p307 = pneg %p148
        %p308 = pneg %p172
        %p309 = pneg %p169
        %p310 = pneg %p193
        %p311 = pneg %p190
        %p312 = pneg %p223
        %p313 = pneg %p220
        %s314 = sand.u32 %s210, 1
        %s315 = scalar_lea.sflag [#allocation8], %s314
        %s316 = sand.u32 %s210, 1
        %s317 = smul.addr %s316, 8
        %s318 = scalar_lea.vmem [#allocation7], %s317
        %p319 = scmp.eq.s32.totalorder %s25, 0
        %s320 = scalar_select %p319, %s26, 0
        %p321 = scmp.lt.s32.totalorder %s320, 0
        %s322 = scalar_select %p321, %s320, 0
        %s323 = smul.addr %s322, 8
        %s324 = scalar_lea.vmem %s0, %s323
        %p325 = scmp.eq.s32.totalorder %s25, 0
        %s326 = scalar_select %p325, %s26, 0
        %p327 = scmp.eq.s32.totalorder %s25, 2
        %s328 = scalar_select %p327, %s26, 0
        %p329 = scmp.lt.s32.totalorder %s328, 0
        %s330 = scalar_select %p329, %s328, 0
        %s331 = smul.addr %s330, 8
        %s332 = scalar_lea.vmem %s1, %s331
        %p333 = scmp.eq.s32.totalorder %s25, 2
        %s334 = scalar_select %p333, %s26, 0
        %p335 = scmp.eq.s32.totalorder %s25, 2
        %s336 = scalar_select %p335, %s26, 0
        %v337 = vld [vmem:[%s6] sm:$0xff]
        %v338 = vld [vmem:[%s6 + $0x8] sm:$0x7]
        %p339 = scmp.eq.s32.totalorder %s25, 0
        %p340 = scmp.eq.s32.totalorder %s26, 0
        %p341 = pnand %p339, %p340
        %p342 = pneg %p341
        // Predicated region
        $region49: #{tpu_custom_call.1} parent=47 // pred_check
          _
        $region50: #{tpu_custom_call.1} parent=47 // pred_check_branch
          %344 = sbr.rel (%p341) target = $region52
        $region51: #{tpu_custom_call.1} parent=47 // pred_region
          %vm345 = vcmask 253952
          %346 = vst.msk [vmem:[#allocation2] sm:$0x1] %vm345, 0.0
          %347 = vst.msk [vmem:[#allocation3] sm:$0x1] %vm345, 0.0
          %vm348 = vcmask 122880
          %349 = vst.msk [vmem:[#allocation4] sm:$0x1] %vm348, 0.0
          %350 = vst.msk [vmem:[#allocation5] sm:$0x1] %vm348, 0.0
        $region52: #{tpu_custom_call.1} parent=47 // pred_fallthru
          _
        // Predicated region
        $region53: #{tpu_custom_call.1} parent=47 // pred_check
          %p351 = pneg %p339
        $region54: #{tpu_custom_call.1} parent=47 // pred_check_branch
          %353 = sbr.rel (%p351) target = $region56
        $region55: #{tpu_custom_call.1} parent=47 // pred_region
          %v354 = vld [vmem:[%s324] sm:$0xff]
          %s355 = smul.u32 %s26, 8
          %s356 = scalar_lea.vmem [#allocation6], %s355
          %vm357 = vcmask 130048
          %358 = vst.msk [vmem:[%s356] sm:$0xff] %vm357, %v354
          %v359 = vld [vmem:[%s2] sm:$0xff]
          %v360 = vld [vmem:[%s2 + $0x8] sm:$0xff]
          %v361 = vlaneseq
          %v362 = vshrl.u32 %v361, 7
          %v363 = vsub.s32 0, %v362
          %v364 = vrot.slane %v337, %v363
          %v366 = vsel %vm357, %v354, 0
          %368 = vmatprep.subr.mxu0 0.0
          %369 = vmatpush1.msra.mxu0 0.0
          %370 = vmatprep.subr.mxu0 0.0
          %371 = vmatpush1.msra.mxu0 0.0
          %372 = vmatprep.subr.mxu0 0.0
          %373 = vmatpush1.msra.mxu0 0.0
          %374 = vmatprep.subr.mxu0 0.0
          %375 = vmatpush1.msra.mxu0 0.0
          %376 = vmatprep.subr.mxu0 0.0
          %377 = vmatpush1.msra.mxu0 0.0
          %378 = vmatprep.subr.mxu0 0.0
          %379 = vmatpush1.msra.mxu0 0.0
          %380 = vmatprep.subr.mxu0 0.0
          %381 = vmatpush1.msra.mxu0 0.0
          %382 = vmatprep.subr.mxu0 0.0
          %383 = vmatpush1.msra.mxu0 0.0
          %384 = vmatprep.subr.mxu0 0.0
          %385 = vmatpush1.msra.mxu0 0.0
          %386 = vmatprep.subr.mxu0 0.0
          %387 = vmatpush1.msra.mxu0 0.0
          %388 = vmatprep.subr.mxu0 0.0
          %389 = vmatpush1.msra.mxu0 0.0
          %390 = vmatprep.subr.mxu0 0.0
          %391 = vmatpush1.msra.mxu0 0.0
          %392 = vmatprep.subr.mxu0 0.0
          %393 = vmatpush1.msra.mxu0 0.0
          %394 = vmatprep.subr.mxu0 0.0
          %395 = vmatpush1.msra.mxu0 0.0
          %396 = vmatprep.subr.mxu0 0.0
          %397 = vmatpush1.msra.mxu0 %v360
          %398 = vmatprep.subr.mxu0 0.0
          %399 = vmatpush1.msra.mxu0 %v359
          %400 = vmatprep.subr.mxu0 0.0
          %401 = vmatpush2.msra.mxu0 0.0
          %402 = vmatprep.subr.mxu0 0.0
          %403 = vmatpush2.msra.mxu0 0.0
          %404 = vmatprep.subr.mxu0 0.0
          %405 = vmatpush2.msra.mxu0 0.0
          %406 = vmatprep.subr.mxu0 0.0
          %407 = vmatpush2.msra.mxu0 0.0
          %408 = vmatprep.subr.mxu0 0.0
          %409 = vmatpush2.msra.mxu0 0.0
          %410 = vmatprep.subr.mxu0 0.0
          %411 = vmatpush2.msra.mxu0 0.0
          %412 = vmatprep.subr.mxu0 0.0
          %413 = vmatpush2.msra.mxu0 0.0
          %414 = vmatprep.subr.mxu0 0.0
          %415 = vmatpush2.msra.mxu0 0.0
          %416 = vmatprep.subr.mxu0 0.0
          %417 = vmatpush2.msra.mxu0 0.0
          %418 = vmatprep.subr.mxu0 0.0
          %419 = vmatpush2.msra.mxu0 0.0
          %420 = vmatprep.subr.mxu0 0.0
          %421 = vmatpush2.msra.mxu0 0.0
          %422 = vmatprep.subr.mxu0 0.0
          %423 = vmatpush2.msra.mxu0 0.0
          %424 = vmatprep.subr.mxu0 0.0
          %425 = vmatpush2.msra.mxu0 0.0
          %426 = vmatprep.subr.mxu0 0.0
          %427 = vmatpush2.msra.mxu0 0.0
          %428 = vmatprep.subr.mxu0 0.0
          %429 = vmatpush2.msra.mxu0 0.0
          %430 = vmatprep.subr.mxu0 0.0
          %431 = vmatpush2.msra.mxu0 0.0
          %432 = vmatprep.mubr.f32.mxu0 0.0
          %433 = vmatmul.mubr.f32.gmra.mxu0 %v366
          %v434 = vpop.f32.mrf.mxu0
          %v435 = vadd.f32 %v364, %v434
          %v436 = vpop.f32.mrf.mxu0
          %437 = vdwg.mxu0
          %v438 = vld [vmem:[#allocation2] sm:$0x1]
          %vm439 = vcmask 261120
          %v440 = vsel %vm439, %v435, 0.0
          %v441 = vrot.slane %v440, 4
          %v442 = vadd.f32 %v440, %v441
          %v443 = vrot.slane %v442, 2
          %v444 = vadd.f32 %v442, %v443
          %v445 = vrot.slane %v444, 1
          %v446 = vadd.f32 %v444, %v445
          %v447 = vadd.f32 %v438, %v446
          %vm448 = vcmask 253952
          %449 = vst.msk [vmem:[#allocation2] sm:$0x1] %vm448, %v447
          %v450 = vld [vmem:[#allocation3] sm:$0x1]
          %v451 = vmul.f32 %v435, %v435
          %v452 = vsel %vm439, %v451, 0.0
          %v453 = vrot.slane %v452, 4
          %v454 = vadd.f32 %v452, %v453
          %v455 = vrot.slane %v454, 2
          %v456 = vadd.f32 %v454, %v455
          %v457 = vrot.slane %v456, 1
          %v458 = vadd.f32 %v456, %v457
          %v459 = vadd.f32 %v450, %v458
          %460 = vst.msk [vmem:[#allocation3] sm:$0x1] %vm448, %v459
          // Predicated region
          $region57: #{tpu_custom_call.1} parent=55 // pred_check
            %p461 = pneg %p340
          $region58: #{tpu_custom_call.1} parent=55 // pred_check_branch
            %463 = sbr.rel (%p461) target = $region60
          $region59: #{tpu_custom_call.1} parent=55 // pred_region
            %v464 = vld [vmem:[#allocation2] sm:$0x1]
            %v465 = vmul.f32 %v464, 0.125
            %v466 = vld [vmem:[#allocation3] sm:$0x1]
            %v467 = vmul.f32 %v466, 0.125
            %v468 = vmul.f32 %v465, %v465
            %v469 = vsub.f32 %v467, %v468
            %v470 = vadd.f32 %v469, 1e-05
            %v471 = vrsqrt.pop %v470
            %v474 = vunpack.c.l.s4 1966171168
            %v475 = vunpack.c.0.s8 %v474
            %v476 = vlaneseq
            %v477 = vshrl.u32 %v476, 7
            %v478 = vsub.s32 %v475, %v477
            %v479 = vrot.slane %v337, %v478
            %v480 = vcombine.high %v479, %v479
            %v482 = vunpack.c.l.s4 1966171168
            %v483 = vunpack.c.0.s8 %v482
            %v484 = vlaneseq
            %v485 = vshrl.u32 %v484, 7
            %v486 = vsub.s32 %v483, %v485
            %v487 = vrot.slane %v480, %v486
            %v489 = vmul.f32 %v471, %v487
            %490 = vst.msk [vmem:[#allocation2] sm:$0x1] %vm448, %v489
            %v491 = vmul.f32 %v465, %v489
            %v493 = vlaneseq
            %v494 = vshrl.u32 %v493, 7
            %v495 = vsub.s32 0, %v494
            %v496 = vrot.slane %v491, %v495
            %v498 = vsub.f32 %v337, %v496
            %vm499 = vcmask 256002
            %500 = vst.msk [vmem:[#allocation3 - $0x2] sm:$0x4] %vm499, %v498
          $region60: #{tpu_custom_call.1} parent=55 // pred_fallthru
            _
        $region56: #{tpu_custom_call.1} parent=47 // pred_fallthru
          _
        %p501 = scmp.eq.s32.totalorder %s25, 1
        // Predicated region
        $region61: #{tpu_custom_call.1} parent=47 // pred_check
          %p502 = pneg %p501
        $region62: #{tpu_custom_call.1} parent=47 // pred_check_branch
          %504 = sbr.rel (%p502) target = $region64
        $region63: #{tpu_custom_call.1} parent=47 // pred_region
          %s505 = smul.u32 %s26, 8
          %s506 = scalar_lea.vmem [#allocation6], %s505
          %v507 = vld [vmem:[%s506] sm:$0xff]
          %v508 = vld [vmem:[%s2] sm:$0xff]
          %v509 = vld [vmem:[%s2 + $0x8] sm:$0xff]
          %v510 = vlaneseq
          %v511 = vshrl.u32 %v510, 7
          %v512 = vsub.s32 0, %v511
          %v513 = vrot.slane %v337, %v512
          %vm514 = vcmask 130048
          %v516 = vsel %vm514, %v507, 0
          %518 = vmatprep.subr.mxu0 0.0
          %519 = vmatpush1.msra.mxu0 0.0
          %520 = vmatprep.subr.mxu0 0.0
          %521 = vmatpush1.msra.mxu0 0.0
          %522 = vmatprep.subr.mxu0 0.0
          %523 = vmatpush1.msra.mxu0 0.0
          %524 = vmatprep.subr.mxu0 0.0
          %525 = vmatpush1.msra.mxu0 0.0
          %526 = vmatprep.subr.mxu0 0.0
          %527 = vmatpush1.msra.mxu0 0.0
          %528 = vmatprep.subr.mxu0 0.0
          %529 = vmatpush1.msra.mxu0 0.0
          %530 = vmatprep.subr.mxu0 0.0
          %531 = vmatpush1.msra.mxu0 0.0
          %532 = vmatprep.subr.mxu0 0.0
          %533 = vmatpush1.msra.mxu0 0.0
          %534 = vmatprep.subr.mxu0 0.0
          %535 = vmatpush1.msra.mxu0 0.0
          %536 = vmatprep.subr.mxu0 0.0
          %537 = vmatpush1.msra.mxu0 0.0
          %538 = vmatprep.subr.mxu0 0.0
          %539 = vmatpush1.msra.mxu0 0.0
          %540 = vmatprep.subr.mxu0 0.0
          %541 = vmatpush1.msra.mxu0 0.0
          %542 = vmatprep.subr.mxu0 0.0
          %543 = vmatpush1.msra.mxu0 0.0
          %544 = vmatprep.subr.mxu0 0.0
          %545 = vmatpush1.msra.mxu0 0.0
          %546 = vmatprep.subr.mxu0 0.0
          %547 = vmatpush1.msra.mxu0 %v509
          %548 = vmatprep.subr.mxu0 0.0
          %549 = vmatpush1.msra.mxu0 %v508
          %550 = vmatprep.subr.mxu0 0.0
          %551 = vmatpush2.msra.mxu0 0.0
          %552 = vmatprep.subr.mxu0 0.0
          %553 = vmatpush2.msra.mxu0 0.0
          %554 = vmatprep.subr.mxu0 0.0
          %555 = vmatpush2.msra.mxu0 0.0
          %556 = vmatprep.subr.mxu0 0.0
          %557 = vmatpush2.msra.mxu0 0.0
          %558 = vmatprep.subr.mxu0 0.0
          %559 = vmatpush2.msra.mxu0 0.0
          %560 = vmatprep.subr.mxu0 0.0
          %561 = vmatpush2.msra.mxu0 0.0
          %562 = vmatprep.subr.mxu0 0.0
          %563 = vmatpush2.msra.mxu0 0.0
          %564 = vmatprep.subr.mxu0 0.0
          %565 = vmatpush2.msra.mxu0 0.0
          %566 = vmatprep.subr.mxu0 0.0
          %567 = vmatpush2.msra.mxu0 0.0
          %568 = vmatprep.subr.mxu0 0.0
          %569 = vmatpush2.msra.mxu0 0.0
          %570 = vmatprep.subr.mxu0 0.0
          %571 = vmatpush2.msra.mxu0 0.0
          %572 = vmatprep.subr.mxu0 0.0
          %573 = vmatpush2.msra.mxu0 0.0
          %574 = vmatprep.subr.mxu0 0.0
          %575 = vmatpush2.msra.mxu0 0.0
          %576 = vmatprep.subr.mxu0 0.0
          %577 = vmatpush2.msra.mxu0 0.0
          %578 = vmatprep.subr.mxu0 0.0
          %579 = vmatpush2.msra.mxu0 0.0
          %580 = vmatprep.subr.mxu0 0.0
          %581 = vmatpush2.msra.mxu0 0.0
          %582 = vmatprep.mubr.f32.mxu0 0.0
          %583 = vmatmul.mubr.f32.gmra.mxu0 %v516
          %v584 = vpop.f32.mrf.mxu0
          %v585 = vadd.f32 %v513, %v584
          %v586 = vpop.f32.mrf.mxu0
          %587 = vdwg.mxu0
          %v588 = vld [vmem:[#allocation2] sm:$0x1]
          %v590 = vlaneseq
          %v591 = vshrl.u32 %v590, 7
          %v592 = vsub.s32 0, %v591
          %v593 = vrot.slane %v588, %v592
          %v595 = vmul.f32 %v585, %v593
          %v596 = vld [vmem:[#allocation3] sm:$0x1]
          %v598 = vlaneseq
          %v599 = vshrl.u32 %v598, 7
          %v600 = vsub.s32 0, %v599
          %v601 = vrot.slane %v596, %v600
          %v603 = vadd.f32 %v595, %v601
          %v604 = vmax.f32 %v603, 0.0
          %v605 = vld [vmem:[%s3] sm:$0xff]
          %v606 = vld [vmem:[%s3 + $0x8] sm:$0xff]
          %v607 = vld [vmem:[%s3 + $0x10] sm:$0xff]
          %v608 = vld [vmem:[%s3 + $0x18] sm:$0xff]
          %v609 = vlaneseq
          %v610 = vshrl.u32 %v609, 7
          %v611 = vsub.s32 3, %v610
          %v612 = vrot.slane %v337, %v611
          %vm613 = vcmask 261120
          %v615 = vsel %vm613, %v604, 0
          %617 = vmatprep.subr.mxu0 0.0
          %618 = vmatpush1.msra.mxu0 0.0
          %619 = vmatprep.subr.mxu0 0.0
          %620 = vmatpush1.msra.mxu0 0.0
          %621 = vmatprep.subr.mxu0 0.0
          %622 = vmatpush1.msra.mxu0 0.0
          %623 = vmatprep.subr.mxu0 0.0
          %624 = vmatpush1.msra.mxu0 0.0
          %625 = vmatprep.subr.mxu0 0.0
          %626 = vmatpush1.msra.mxu0 0.0
          %627 = vmatprep.subr.mxu0 0.0
          %628 = vmatpush1.msra.mxu0 0.0
          %629 = vmatprep.subr.mxu0 0.0
          %630 = vmatpush1.msra.mxu0 0.0
          %631 = vmatprep.subr.mxu0 0.0
          %632 = vmatpush1.msra.mxu0 0.0
          %633 = vmatprep.subr.mxu0 0.0
          %634 = vmatpush1.msra.mxu0 0.0
          %635 = vmatprep.subr.mxu0 0.0
          %636 = vmatpush1.msra.mxu0 0.0
          %637 = vmatprep.subr.mxu0 0.0
          %638 = vmatpush1.msra.mxu0 0.0
          %639 = vmatprep.subr.mxu0 0.0
          %640 = vmatpush1.msra.mxu0 0.0
          %641 = vmatprep.subr.mxu0 0.0
          %642 = vmatpush1.msra.mxu0 %v608
          %643 = vmatprep.subr.mxu0 0.0
          %644 = vmatpush1.msra.mxu0 %v607
          %645 = vmatprep.subr.mxu0 0.0
          %646 = vmatpush1.msra.mxu0 %v606
          %647 = vmatprep.subr.mxu0 0.0
          %648 = vmatpush1.msra.mxu0 %v605
          %649 = vmatprep.subr.mxu0 0.0
          %650 = vmatpush2.msra.mxu0 0.0
          %651 = vmatprep.subr.mxu0 0.0
          %652 = vmatpush2.msra.mxu0 0.0
          %653 = vmatprep.subr.mxu0 0.0
          %654 = vmatpush2.msra.mxu0 0.0
          %655 = vmatprep.subr.mxu0 0.0
          %656 = vmatpush2.msra.mxu0 0.0
          %657 = vmatprep.subr.mxu0 0.0
          %658 = vmatpush2.msra.mxu0 0.0
          %659 = vmatprep.subr.mxu0 0.0
          %660 = vmatpush2.msra.mxu0 0.0
          %661 = vmatprep.subr.mxu0 0.0
          %662 = vmatpush2.msra.mxu0 0.0
          %663 = vmatprep.subr.mxu0 0.0
          %664 = vmatpush2.msra.mxu0 0.0
          %665 = vmatprep.subr.mxu0 0.0
          %666 = vmatpush2.msra.mxu0 0.0
          %667 = vmatprep.subr.mxu0 0.0
          %668 = vmatpush2.msra.mxu0 0.0
          %669 = vmatprep.subr.mxu0 0.0
          %670 = vmatpush2.msra.mxu0 0.0
          %671 = vmatprep.subr.mxu0 0.0
          %672 = vmatpush2.msra.mxu0 0.0
          %673 = vmatprep.subr.mxu0 0.0
          %674 = vmatpush2.msra.mxu0 0.0
          %675 = vmatprep.subr.mxu0 0.0
          %676 = vmatpush2.msra.mxu0 0.0
          %677 = vmatprep.subr.mxu0 0.0
          %678 = vmatpush2.msra.mxu0 0.0
          %679 = vmatprep.subr.mxu0 0.0
          %680 = vmatpush2.msra.mxu0 0.0
          %681 = vmatprep.mubr.f32.mxu0 0.0
          %682 = vmatmul.mubr.f32.gmra.mxu0 %v615
          %v683 = vpop.f32.mrf.mxu0
          %v684 = vadd.f32 %v612, %v683
          %v685 = vpop.f32.mrf.mxu0
          %686 = vdwg.mxu0
          %v687 = vld [vmem:[#allocation4] sm:$0x1]
          %v688 = vsel %vm514, %v684, 0.0
          %v689 = vrot.slane %v688, 4
          %v690 = vadd.f32 %v688, %v689
          %v691 = vrot.slane %v690, 2
          %v692 = vadd.f32 %v690, %v691
          %v693 = vrot.slane %v692, 1
          %v694 = vadd.f32 %v692, %v693
          %v695 = vadd.f32 %v687, %v694
          %vm696 = vcmask 122880
          %697 = vst.msk [vmem:[#allocation4] sm:$0x1] %vm696, %v695
          %v698 = vld [vmem:[#allocation5] sm:$0x1]
          %v699 = vmul.f32 %v684, %v684
          %v700 = vsel %vm514, %v699, 0.0
          %v701 = vrot.slane %v700, 4
          %v702 = vadd.f32 %v700, %v701
          %v703 = vrot.slane %v702, 2
          %v704 = vadd.f32 %v702, %v703
          %v705 = vrot.slane %v704, 1
          %v706 = vadd.f32 %v704, %v705
          %v707 = vadd.f32 %v698, %v706
          %708 = vst.msk [vmem:[#allocation5] sm:$0x1] %vm696, %v707
          // Predicated region
          $region65: #{tpu_custom_call.1} parent=63 // pred_check
            %p709 = pneg %p340
          $region66: #{tpu_custom_call.1} parent=63 // pred_check_branch
            %711 = sbr.rel (%p709) target = $region68
          $region67: #{tpu_custom_call.1} parent=63 // pred_region
            %v712 = vld [vmem:[#allocation4] sm:$0x1]
            %v713 = vmul.f32 %v712, 0.125
            %v714 = vld [vmem:[#allocation5] sm:$0x1]
            %v715 = vmul.f32 %v714, 0.125
            %v716 = vmul.f32 %v713, %v713
            %v717 = vsub.f32 %v715, %v716
            %v718 = vadd.f32 %v717, 1e-05
            %v719 = vrsqrt.pop %v718
            %v721 = vcombine.high %v337, %v337
            %v723 = vunpack.c.l.s4 1966171168
            %v724 = vunpack.c.0.s8 %v723
            %v725 = vlaneseq
            %v726 = vshrl.u32 %v725, 7
            %v727 = vsub.s32 %v724, %v726
            %v728 = vrot.slane %v721, %v727
            %v730 = vunpack.c.l.s4 1966171168
            %v731 = vunpack.c.0.s8 %v730
            %v732 = vlaneseq
            %v733 = vshrl.u32 %v732, 7
            %v734 = vsub.s32 %v731, %v733
            %v735 = vrot.slane %v728, %v734
            %v737 = vmul.f32 %v719, %v735
            %738 = vst.msk [vmem:[#allocation4] sm:$0x1] %vm696, %v737
            %v739 = vmul.f32 %v713, %v737
            %v741 = vlaneseq
            %v742 = vshrl.u32 %v741, 7
            %v743 = vsub.s32 0, %v742
            %v744 = vrot.slane %v739, %v743
            %v746 = vsub.f32 %v337, %v744
            %vm747 = vcmask 128005
            %748 = vst.msk [vmem:[#allocation5 - $0x5] sm:$0x20] %vm747, %v746
          $region68: #{tpu_custom_call.1} parent=63 // pred_fallthru
            _
        $region64: #{tpu_custom_call.1} parent=47 // pred_fallthru
          _
        %p749 = scmp.eq.s32.totalorder %s25, 2
        // Predicated region
        $region69: #{tpu_custom_call.1} parent=47 // pred_check
          %p750 = pneg %p749
        $region70: #{tpu_custom_call.1} parent=47 // pred_check_branch
          %752 = sbr.rel (%p750) target = $region72
        $region71: #{tpu_custom_call.1} parent=47 // pred_region
          %s753 = smul.u32 %s26, 8
          %s754 = scalar_lea.vmem [#allocation6], %s753
          %v755 = vld [vmem:[%s754] sm:$0xff]
          %v756 = vld [vmem:[%s2] sm:$0xff]
          %v757 = vld [vmem:[%s2 + $0x8] sm:$0xff]
          %v758 = vlaneseq
          %v759 = vshrl.u32 %v758, 7
          %v760 = vsub.s32 0, %v759
          %v761 = vrot.slane %v337, %v760
          %vm762 = vcmask 130048
          %v764 = vsel %vm762, %v755, 0
          %766 = vmatprep.subr.mxu0 0.0
          %767 = vmatpush1.msra.mxu0 0.0
          %768 = vmatprep.subr.mxu0 0.0
          %769 = vmatpush1.msra.mxu0 0.0
          %770 = vmatprep.subr.mxu0 0.0
          %771 = vmatpush1.msra.mxu0 0.0
          %772 = vmatprep.subr.mxu0 0.0
          %773 = vmatpush1.msra.mxu0 0.0
          %774 = vmatprep.subr.mxu0 0.0
          %775 = vmatpush1.msra.mxu0 0.0
          %776 = vmatprep.subr.mxu0 0.0
          %777 = vmatpush1.msra.mxu0 0.0
          %778 = vmatprep.subr.mxu0 0.0
          %779 = vmatpush1.msra.mxu0 0.0
          %780 = vmatprep.subr.mxu0 0.0
          %781 = vmatpush1.msra.mxu0 0.0
          %782 = vmatprep.subr.mxu0 0.0
          %783 = vmatpush1.msra.mxu0 0.0
          %784 = vmatprep.subr.mxu0 0.0
          %785 = vmatpush1.msra.mxu0 0.0
          %786 = vmatprep.subr.mxu0 0.0
          %787 = vmatpush1.msra.mxu0 0.0
          %788 = vmatprep.subr.mxu0 0.0
          %789 = vmatpush1.msra.mxu0 0.0
          %790 = vmatprep.subr.mxu0 0.0
          %791 = vmatpush1.msra.mxu0 0.0
          %792 = vmatprep.subr.mxu0 0.0
          %793 = vmatpush1.msra.mxu0 0.0
          %794 = vmatprep.subr.mxu0 0.0
          %795 = vmatpush1.msra.mxu0 %v757
          %796 = vmatprep.subr.mxu0 0.0
          %797 = vmatpush1.msra.mxu0 %v756
          %798 = vmatprep.subr.mxu0 0.0
          %799 = vmatpush2.msra.mxu0 0.0
          %800 = vmatprep.subr.mxu0 0.0
          %801 = vmatpush2.msra.mxu0 0.0
          %802 = vmatprep.subr.mxu0 0.0
          %803 = vmatpush2.msra.mxu0 0.0
          %804 = vmatprep.subr.mxu0 0.0
          %805 = vmatpush2.msra.mxu0 0.0
          %806 = vmatprep.subr.mxu0 0.0
          %807 = vmatpush2.msra.mxu0 0.0
          %808 = vmatprep.subr.mxu0 0.0
          %809 = vmatpush2.msra.mxu0 0.0
          %810 = vmatprep.subr.mxu0 0.0
          %811 = vmatpush2.msra.mxu0 0.0
          %812 = vmatprep.subr.mxu0 0.0
          %813 = vmatpush2.msra.mxu0 0.0
          %814 = vmatprep.subr.mxu0 0.0
          %815 = vmatpush2.msra.mxu0 0.0
          %816 = vmatprep.subr.mxu0 0.0
          %817 = vmatpush2.msra.mxu0 0.0
          %818 = vmatprep.subr.mxu0 0.0
          %819 = vmatpush2.msra.mxu0 0.0
          %820 = vmatprep.subr.mxu0 0.0
          %821 = vmatpush2.msra.mxu0 0.0
          %822 = vmatprep.subr.mxu0 0.0
          %823 = vmatpush2.msra.mxu0 0.0
          %824 = vmatprep.subr.mxu0 0.0
          %825 = vmatpush2.msra.mxu0 0.0
          %826 = vmatprep.subr.mxu0 0.0
          %827 = vmatpush2.msra.mxu0 0.0
          %828 = vmatprep.subr.mxu0 0.0
          %829 = vmatpush2.msra.mxu0 0.0
          %830 = vmatprep.mubr.f32.mxu0 0.0
          %831 = vmatmul.mubr.f32.gmra.mxu0 %v764
          %v832 = vpop.f32.mrf.mxu0
          %v833 = vadd.f32 %v761, %v832
          %v834 = vpop.f32.mrf.mxu0
          %835 = vdwg.mxu0
          %v836 = vld [vmem:[#allocation2] sm:$0x1]
          %v838 = vlaneseq
          %v839 = vshrl.u32 %v838, 7
          %v840 = vsub.s32 0, %v839
          %v841 = vrot.slane %v836, %v840
          %v843 = vmul.f32 %v833, %v841
          %v844 = vld [vmem:[#allocation3] sm:$0x1]
          %v846 = vlaneseq
          %v847 = vshrl.u32 %v846, 7
          %v848 = vsub.s32 0, %v847
          %v849 = vrot.slane %v844, %v848
          %v851 = vadd.f32 %v843, %v849
          %v852 = vmax.f32 %v851, 0.0
          %v853 = vld [vmem:[%s3] sm:$0xff]
          %v854 = vld [vmem:[%s3 + $0x8] sm:$0xff]
          %v855 = vld [vmem:[%s3 + $0x10] sm:$0xff]
          %v856 = vld [vmem:[%s3 + $0x18] sm:$0xff]
          %v857 = vlaneseq
          %v858 = vshrl.u32 %v857, 7
          %v859 = vsub.s32 3, %v858
          %v860 = vrot.slane %v337, %v859
          %vm861 = vcmask 261120
          %v863 = vsel %vm861, %v852, 0
          %865 = vmatprep.subr.mxu0 0.0
          %866 = vmatpush1.msra.mxu0 0.0
          %867 = vmatprep.subr.mxu0 0.0
          %868 = vmatpush1.msra.mxu0 0.0
          %869 = vmatprep.subr.mxu0 0.0
          %870 = vmatpush1.msra.mxu0 0.0
          %871 = vmatprep.subr.mxu0 0.0
          %872 = vmatpush1.msra.mxu0 0.0
          %873 = vmatprep.subr.mxu0 0.0
          %874 = vmatpush1.msra.mxu0 0.0
          %875 = vmatprep.subr.mxu0 0.0
          %876 = vmatpush1.msra.mxu0 0.0
          %877 = vmatprep.subr.mxu0 0.0
          %878 = vmatpush1.msra.mxu0 0.0
          %879 = vmatprep.subr.mxu0 0.0
          %880 = vmatpush1.msra.mxu0 0.0
          %881 = vmatprep.subr.mxu0 0.0
          %882 = vmatpush1.msra.mxu0 0.0
          %883 = vmatprep.subr.mxu0 0.0
          %884 = vmatpush1.msra.mxu0 0.0
          %885 = vmatprep.subr.mxu0 0.0
          %886 = vmatpush1.msra.mxu0 0.0
          %887 = vmatprep.subr.mxu0 0.0
          %888 = vmatpush1.msra.mxu0 0.0
          %889 = vmatprep.subr.mxu0 0.0
          %890 = vmatpush1.msra.mxu0 %v856
          %891 = vmatprep.subr.mxu0 0.0
          %892 = vmatpush1.msra.mxu0 %v855
          %893 = vmatprep.subr.mxu0 0.0
          %894 = vmatpush1.msra.mxu0 %v854
          %895 = vmatprep.subr.mxu0 0.0
          %896 = vmatpush1.msra.mxu0 %v853
          %897 = vmatprep.subr.mxu0 0.0
          %898 = vmatpush2.msra.mxu0 0.0
          %899 = vmatprep.subr.mxu0 0.0
          %900 = vmatpush2.msra.mxu0 0.0
          %901 = vmatprep.subr.mxu0 0.0
          %902 = vmatpush2.msra.mxu0 0.0
          %903 = vmatprep.subr.mxu0 0.0
          %904 = vmatpush2.msra.mxu0 0.0
          %905 = vmatprep.subr.mxu0 0.0
          %906 = vmatpush2.msra.mxu0 0.0
          %907 = vmatprep.subr.mxu0 0.0
          %908 = vmatpush2.msra.mxu0 0.0
          %909 = vmatprep.subr.mxu0 0.0
          %910 = vmatpush2.msra.mxu0 0.0
          %911 = vmatprep.subr.mxu0 0.0
          %912 = vmatpush2.msra.mxu0 0.0
          %913 = vmatprep.subr.mxu0 0.0
          %914 = vmatpush2.msra.mxu0 0.0
          %915 = vmatprep.subr.mxu0 0.0
          %916 = vmatpush2.msra.mxu0 0.0
          %917 = vmatprep.subr.mxu0 0.0
          %918 = vmatpush2.msra.mxu0 0.0
          %919 = vmatprep.subr.mxu0 0.0
          %920 = vmatpush2.msra.mxu0 0.0
          %921 = vmatprep.subr.mxu0 0.0
          %922 = vmatpush2.msra.mxu0 0.0
          %923 = vmatprep.subr.mxu0 0.0
          %924 = vmatpush2.msra.mxu0 0.0
          %925 = vmatprep.subr.mxu0 0.0
          %926 = vmatpush2.msra.mxu0 0.0
          %927 = vmatprep.subr.mxu0 0.0
          %928 = vmatpush2.msra.mxu0 0.0
          %929 = vmatprep.mubr.f32.mxu0 0.0
          %930 = vmatmul.mubr.f32.gmra.mxu0 %v863
          %v931 = vpop.f32.mrf.mxu0
          %v932 = vadd.f32 %v860, %v931
          %v933 = vpop.f32.mrf.mxu0
          %934 = vdwg.mxu0
          %v935 = vld [vmem:[#allocation4] sm:$0x1]
          %v937 = vlaneseq
          %v938 = vshrl.u32 %v937, 7
          %v939 = vsub.s32 0, %v938
          %v940 = vrot.slane %v935, %v939
          %v942 = vmul.f32 %v932, %v940
          %v943 = vld [vmem:[#allocation5] sm:$0x1]
          %v945 = vlaneseq
          %v946 = vshrl.u32 %v945, 7
          %v947 = vsub.s32 0, %v946
          %v948 = vrot.slane %v943, %v947
          %v950 = vadd.f32 %v942, %v948
          %v951 = vmax.f32 %v950, 0.0
          %v952 = vld [vmem:[%s4] sm:$0xff]
          %v953 = vld [vmem:[%s4 + $0x8] sm:$0xff]
          %v954 = vlaneseq
          %v955 = vshrl.u32 %v954, 7
          %v956 = vsub.s32 6, %v955
          %v957 = vrot.slane %v337, %v956
          %v959 = vsel %vm762, %v951, 0
          %961 = vmatprep.subr.mxu0 0.0
          %962 = vmatpush1.msra.mxu0 0.0
          %963 = vmatprep.subr.mxu0 0.0
          %964 = vmatpush1.msra.mxu0 0.0
          %965 = vmatprep.subr.mxu0 0.0
          %966 = vmatpush1.msra.mxu0 0.0
          %967 = vmatprep.subr.mxu0 0.0
          %968 = vmatpush1.msra.mxu0 0.0
          %969 = vmatprep.subr.mxu0 0.0
          %970 = vmatpush1.msra.mxu0 0.0
          %971 = vmatprep.subr.mxu0 0.0
          %972 = vmatpush1.msra.mxu0 0.0
          %973 = vmatprep.subr.mxu0 0.0
          %974 = vmatpush1.msra.mxu0 0.0
          %975 = vmatprep.subr.mxu0 0.0
          %976 = vmatpush1.msra.mxu0 0.0
          %977 = vmatprep.subr.mxu0 0.0
          %978 = vmatpush1.msra.mxu0 0.0
          %979 = vmatprep.subr.mxu0 0.0
          %980 = vmatpush1.msra.mxu0 0.0
          %981 = vmatprep.subr.mxu0 0.0
          %982 = vmatpush1.msra.mxu0 0.0
          %983 = vmatprep.subr.mxu0 0.0
          %984 = vmatpush1.msra.mxu0 0.0
          %985 = vmatprep.subr.mxu0 0.0
          %986 = vmatpush1.msra.mxu0 0.0
          %987 = vmatprep.subr.mxu0 0.0
          %988 = vmatpush1.msra.mxu0 0.0
          %989 = vmatprep.subr.mxu0 0.0
          %990 = vmatpush1.msra.mxu0 %v953
          %991 = vmatprep.subr.mxu0 0.0
          %992 = vmatpush1.msra.mxu0 %v952
          %993 = vmatprep.subr.mxu0 0.0
          %994 = vmatpush2.msra.mxu0 0.0
          %995 = vmatprep.subr.mxu0 0.0
          %996 = vmatpush2.msra.mxu0 0.0
          %997 = vmatprep.subr.mxu0 0.0
          %998 = vmatpush2.msra.mxu0 0.0
          %999 = vmatprep.subr.mxu0 0.0
          %1000 = vmatpush2.msra.mxu0 0.0
          %1001 = vmatprep.subr.mxu0 0.0
          %1002 = vmatpush2.msra.mxu0 0.0
          %1003 = vmatprep.subr.mxu0 0.0
          %1004 = vmatpush2.msra.mxu0 0.0
          %1005 = vmatprep.subr.mxu0 0.0
          %1006 = vmatpush2.msra.mxu0 0.0
          %1007 = vmatprep.subr.mxu0 0.0
          %1008 = vmatpush2.msra.mxu0 0.0
          %1009 = vmatprep.subr.mxu0 0.0
          %1010 = vmatpush2.msra.mxu0 0.0
          %1011 = vmatprep.subr.mxu0 0.0
          %1012 = vmatpush2.msra.mxu0 0.0
          %1013 = vmatprep.subr.mxu0 0.0
          %1014 = vmatpush2.msra.mxu0 0.0
          %1015 = vmatprep.subr.mxu0 0.0
          %1016 = vmatpush2.msra.mxu0 0.0
          %1017 = vmatprep.subr.mxu0 0.0
          %1018 = vmatpush2.msra.mxu0 0.0
          %1019 = vmatprep.subr.mxu0 0.0
          %1020 = vmatpush2.msra.mxu0 0.0
          %1021 = vmatprep.subr.mxu0 0.0
          %1022 = vmatpush2.msra.mxu0 0.0
          %1023 = vmatprep.subr.mxu0 0.0
          %1024 = vmatpush2.msra.mxu0 0.0
          %1025 = vmatprep.mubr.f32.mxu0 0.0
          %1026 = vmatmul.mubr.f32.gmra.mxu0 %v959
          %v1027 = vpop.f32.mrf.mxu0
          %v1028 = vadd.f32 %v957, %v1027
          %v1029 = vpop.f32.mrf.mxu0
          %1030 = vdwg.mxu0
          %v1031 = vxor.u32 %v1028, 2147483648
          %v1032 = vmul.f32 %v1031, 1.442695
          %v1033 = vpow.pop %v1032
          %v1034 = vadd.f32 %v1033, 1.0
          %v1035 = vrcp.pop %v1034
          %v1036 = vmul.f32 1.0, %v1035
          %v1037 = vld [vmem:[%s5] sm:$0xff]
          %v1038 = vld [vmem:[%s332] sm:$0xff]
          %1040 = vset.pattern.permute.xlu0 0
          %1041 = vperm.xlu0 %1040, %v1038
          %v1042 = vpop.permute.xlu0 %1041
          %v1044 = vlaneseq
          %v1045 = vshrl.u32 %v1044, 7
          %v1046 = vsub.s32 0, %v1045
          %v1047 = vrot.slane %v338, %v1046
          %v1048 = vmul.f32 %v1042, %v1047
          %vm1049 = vcmask 64512
          %v1051 = vsel %vm1049, %v1036, 0
          %1053 = vmatprep.subr.mxu0 0.0
          %1054 = vmatpush1.msra.mxu0 0.0
          %1055 = vmatprep.subr.mxu0 0.0
          %1056 = vmatpush1.msra.mxu0 0.0
          %1057 = vmatprep.subr.mxu0 0.0
          %1058 = vmatpush1.msra.mxu0 0.0
          %1059 = vmatprep.subr.mxu0 0.0
          %1060 = vmatpush1.msra.mxu0 0.0
          %1061 = vmatprep.subr.mxu0 0.0
          %1062 = vmatpush1.msra.mxu0 0.0
          %1063 = vmatprep.subr.mxu0 0.0
          %1064 = vmatpush1.msra.mxu0 0.0
          %1065 = vmatprep.subr.mxu0 0.0
          %1066 = vmatpush1.msra.mxu0 0.0
          %1067 = vmatprep.subr.mxu0 0.0
          %1068 = vmatpush1.msra.mxu0 0.0
          %1069 = vmatprep.subr.mxu0 0.0
          %1070 = vmatpush1.msra.mxu0 0.0
          %1071 = vmatprep.subr.mxu0 0.0
          %1072 = vmatpush1.msra.mxu0 0.0
          %1073 = vmatprep.subr.mxu0 0.0
          %1074 = vmatpush1.msra.mxu0 0.0
          %1075 = vmatprep.subr.mxu0 0.0
          %1076 = vmatpush1.msra.mxu0 0.0
          %1077 = vmatprep.subr.mxu0 0.0
          %1078 = vmatpush1.msra.mxu0 0.0
          %1079 = vmatprep.subr.mxu0 0.0
          %1080 = vmatpush1.msra.mxu0 0.0
          %1081 = vmatprep.subr.mxu0 0.0
          %1082 = vmatpush1.msra.mxu0 0.0
          %1083 = vmatprep.subr.mxu0 0.0
          %1084 = vmatpush1.msra.mxu0 %v1037
          %1085 = vmatprep.subr.mxu0 0.0
          %1086 = vmatpush2.msra.mxu0 0.0
          %1087 = vmatprep.subr.mxu0 0.0
          %1088 = vmatpush2.msra.mxu0 0.0
          %1089 = vmatprep.subr.mxu0 0.0
          %1090 = vmatpush2.msra.mxu0 0.0
          %1091 = vmatprep.subr.mxu0 0.0
          %1092 = vmatpush2.msra.mxu0 0.0
          %1093 = vmatprep.subr.mxu0 0.0
          %1094 = vmatpush2.msra.mxu0 0.0
          %1095 = vmatprep.subr.mxu0 0.0
          %1096 = vmatpush2.msra.mxu0 0.0
          %1097 = vmatprep.subr.mxu0 0.0
          %1098 = vmatpush2.msra.mxu0 0.0
          %1099 = vmatprep.subr.mxu0 0.0
          %1100 = vmatpush2.msra.mxu0 0.0
          %1101 = vmatprep.subr.mxu0 0.0
          %1102 = vmatpush2.msra.mxu0 0.0
          %1103 = vmatprep.subr.mxu0 0.0
          %1104 = vmatpush2.msra.mxu0 0.0
          %1105 = vmatprep.subr.mxu0 0.0
          %1106 = vmatpush2.msra.mxu0 0.0
          %1107 = vmatprep.subr.mxu0 0.0
          %1108 = vmatpush2.msra.mxu0 0.0
          %1109 = vmatprep.subr.mxu0 0.0
          %1110 = vmatpush2.msra.mxu0 0.0
          %1111 = vmatprep.subr.mxu0 0.0
          %1112 = vmatpush2.msra.mxu0 0.0
          %1113 = vmatprep.subr.mxu0 0.0
          %1114 = vmatpush2.msra.mxu0 0.0
          %1115 = vmatprep.subr.mxu0 0.0
          %1116 = vmatpush2.msra.mxu0 0.0
          %1117 = vmatprep.mubr.f32.mxu0 0.0
          %1118 = vmatmul.mubr.f32.gmra.mxu0 %v1051
          %v1119 = vpop.f32.mrf.mxu0
          %v1120 = vadd.f32 %v1048, %v1119
          %v1121 = vpop.f32.mrf.mxu0
          %1122 = vdwg.mxu0
          %v1123 = vlaneseq
          %v1124 = vshrl.u32 %v1123, 7
          %v1125 = vsub.s32 7, %v1124
          %v1126 = vrot.slane %v337, %v1125
          %v1127 = vadd.f32 %v1120, %v1126
          %v1128 = vmax.f32 %v1127, 0.0
          %v1129 = vlaneseq
          %v1130 = vshrl.u32 %v1129, 7
          %v1131 = vsub.s32 1, %v1130
          %v1132 = vrot.slane %v338, %v1131
          %v1133 = vmul.f32 %v1128, %v1132
          %v1134 = vsel %vm762, %v1133, 0.0
          %1135 = vadd.xlane.f32.xlu0 %v1134
          %v1136 = vpop.xlane.xlu0 %1135
          %v1137 = vlaneseq
          %v1138 = vshrl.u32 %v1137, 7
          %v1139 = vsub.s32 2, %v1138
          %v1140 = vrot.slane %v338, %v1139
          %v1141 = vadd.f32 %v1136, %v1140
          %1143 = vrot.lane.b32.xlu0 %v1141, 8
          %v1144 = vpop.permute.xlu0 %1143
          %v1146 = vsel %vm1049, %v1036, %v1144
          %vm1147 = vcmask 72704
          %1148 = vst.msk [vmem:[%s318] sm:$0xff] %vm1147, %v1146
        $region72: #{tpu_custom_call.1} parent=47 // pred_fallthru
          _
        %s1149 = sand.u32 %s210, 1
        %s1150 = scalar_lea.sflag [#allocation8], %s1149
        %s1151 = sand.u32 %s210, 1
        %s1152 = smul.addr %s1151, 8
        %s1153 = scalar_lea.vmem [#allocation7], %s1152
        // Predicated region
        $region73: #{tpu_custom_call.1} parent=47 // pred_check
          %p1154 = pneg %p220
        $region74: #{tpu_custom_call.1} parent=47 // pred_check_branch
          %1156 = sbr.rel (%p1154) target = $region76
        $region75: #{tpu_custom_call.1} parent=47 // pred_region
          %p1157 = scmp.eq.s32.totalorder %s25, 2
          %s1158 = scalar_select %p1157, %s26, 0
          %s1160 = ssub.s32 128, 128
          %1161 = vsyncadd %s1150, %s1160
          %s1162 = smul.addr %s1158, 128
          %s1163 = scalar_lea.hbm %s7, %s1162
          %s1165 = sshll.u32 %s1153, 4
          %s1166 = int_to_ptr.vmem [resolvable:$true] %s1165
          %1168 = dma.vmem_to_hbm [thread:$0]  %s1166, 128, %s1163, %s1150
        $region76: #{tpu_custom_call.1} parent=47 // pred_fallthru
          _
      $region48: #{tpu_custom_call.1} parent=5 // pred_fallthru
        _
      %p1169 = scmp.le.s32.totalorder 2, %s16
      // Predicated region
      $region77: #{tpu_custom_call.1} parent=5 // pred_check
        %p1170 = pneg %p1169
      $region78: #{tpu_custom_call.1} parent=5 // pred_check_branch
        %1172 = sbr.rel (%p1170) target = $region80
      $region79: #{tpu_custom_call.1} parent=5 // pred_region
        %s1173 = ssub.s32 %s16, 2
        // Predicated region
        $region81: #{tpu_custom_call.1} parent=79 // pred_check
          %p1174 = pneg %p226
        $region82: #{tpu_custom_call.1} parent=79 // pred_check_branch
          %1176 = sbr.rel (%p1174) target = $region84
        $region83: #{tpu_custom_call.1} parent=79 // pred_region
          %s1177 = sand.u32 %s211, 1
          %s1178 = scalar_lea.sflag [#allocation8], %s1177
          %s1179 = sand.u32 %s211, 1
          %s1180 = smul.addr %s1179, 8
          %s1181 = scalar_lea.vmem [#allocation7], %s1180
          %1182 = dma.done %s1178, 128
        $region84: #{tpu_custom_call.1} parent=79 // pred_fallthru
          _
      $region80: #{tpu_custom_call.1} parent=5 // pred_fallthru
        _
    $region6: #{tpu_custom_call.1} parent=1 // loop_footer
      %s20 = sadd.s32 1, %s16
    $region7: #{tpu_custom_call.1} parent=1 // loop_footer_branch
      %15 = sbr.rel target = $region3
    $region8: #{tpu_custom_call.1} parent=1 // loop_exit
      _
    %1183 = vsyncpa [#allocation8], 1
    %s1184 = scalar_lea.sflag [#allocation8], 1
    %1185 = vsyncpa %s1184, 1

</llo_original>
